<compile_context>
chip_gen: v7x
topology: tpu7x:2x2x1
jax: 0.10.0
libtpu: 0.0.40
codegen_flags: <defaults>
</compile_context>

<pallas_src>
import functools

import numpy as np
import jax
import jax.numpy as jnp
from jax import lax
from jax.experimental import pallas as pl
from jax.experimental.pallas import tpu as pltpu


# ---------------------------------------------------------------------------
# Pallas kernel: one (channel-tile, ROI) pair per grid step.
# ---------------------------------------------------------------------------
def _roi_pool_kernel(batch_idx_ref,             # SMEM [K]      (index_map only)
                     hstart_ref, hend_ref,      # SMEM [K*PH] int32
                     wstart_ref, wend_ref,      # SMEM [K*PW] int32
                     orig_idx_ref,              # SMEM [K]      (index_map only)
                     hidx_ref,                  # VMEM [H, 1, Cb] int32 row indices
                     img_ref,                   # VMEM [1, H, W, Cb]
                     out_ref,                   # VMEM [1, PH*PW, Cb]
                     *, H, W, PH, PW):
    del batch_idx_ref, orig_idx_ref             # consumed by the index_maps
    r = pl.program_id(1)                        # ROI index (innermost grid axis)

    img = img_ref[0]                            # [H, W, Cb]
    h_idx = hidx_ref[...]                       # [H, 1, Cb]
    Cb = img.shape[-1]

    if jnp.issubdtype(img_ref.dtype, jnp.floating):
        neg = jnp.asarray(-jnp.inf, dtype=img_ref.dtype)
    else:                                       # integer feature maps
        neg = jnp.asarray(jnp.iinfo(img_ref.dtype).min, dtype=img_ref.dtype)

    w_iota = lax.broadcasted_iota(jnp.int32, (W, 1), 0)    # [W, 1]
    pw_rows = lax.broadcasted_iota(jnp.int32, (PW, 1), 0)  # [PW, 1]

    for ph in range(PH):
        hs = hstart_ref[r * PH + ph]
        he = hend_ref[r * PH + ph]
        row_empty = he <= hs

        # ---- heavy pass: mask rows outside [hs, he) and reduce over H ------
        # H is the leading (non-tiled) axis -> pure elementwise VALU max,
        # no cross-sublane (XLU) work on the big array.
        mh = (h_idx >= hs) & (h_idx < he)                   # [H, 1, Cb]
        row_max = jnp.max(jnp.where(mh, img, neg), axis=0)  # [W, Cb]

        # ---- small pass: per column-bin max over the [W, Cb] row maxima ----
        tile = jnp.zeros((PW, Cb), dtype=out_ref.dtype)     # one tile per ph
        for pw in range(PW):
            ws = wstart_ref[r * PW + pw]
            we = wend_ref[r * PW + pw]
            mw = (w_iota >= ws) & (w_iota < we)             # [W, 1]
            mx = jnp.max(jnp.where(mw, row_max, neg),
                         axis=0, keepdims=True)             # [1, Cb]
            empty = jnp.logical_or(row_empty, we <= ws)
            mx = jnp.where(empty, jnp.zeros_like(mx), mx)
            tile = jnp.where(pw_rows == pw, mx.astype(out_ref.dtype), tile)
        # one store per ph instead of PW single-sublane masked stores
        out_ref[0, ph * PW:(ph + 1) * PW, :] = tile


# ---------------------------------------------------------------------------
# Plain-JAX glue: ROI quantization (matches torchvision roi_pool exactly).
# ---------------------------------------------------------------------------
def _round_half_away(x):
    return jnp.where(x >= 0, jnp.floor(x + 0.5), jnp.ceil(x - 0.5))


def _compute_bins(rois, spatial_scale, PH, PW, H, W):
    batch_idx = rois[:, 0].astype(jnp.int32)
    coords = rois[:, 1:] * spatial_scale
    r = _round_half_away(coords).astype(jnp.int32)
    rsw, rsh, rew, reh = r[:, 0], r[:, 1], r[:, 2], r[:, 3]
    roi_w = jnp.maximum(rew - rsw + 1, 1).astype(jnp.float32)
    roi_h = jnp.maximum(reh - rsh + 1, 1).astype(jnp.float32)
    bsh = roi_h / PH
    bsw = roi_w / PW
    ph_i = jnp.arange(PH, dtype=jnp.float32)
    pw_i = jnp.arange(PW, dtype=jnp.float32)
    hstart = jnp.clip(jnp.floor(ph_i[None] * bsh[:, None]).astype(jnp.int32)
                      + rsh[:, None], 0, H)
    hend = jnp.clip(jnp.ceil((ph_i[None] + 1.0) * bsh[:, None]).astype(jnp.int32)
                    + rsh[:, None], 0, H)
    wstart = jnp.clip(jnp.floor(pw_i[None] * bsw[:, None]).astype(jnp.int32)
                      + rsw[:, None], 0, W)
    wend = jnp.clip(jnp.ceil((pw_i[None] + 1.0) * bsw[:, None]).astype(jnp.int32)
                    + rsw[:, None], 0, W)
    return batch_idx, hstart, hend, wstart, wend


def _vmem_capacity_bytes():
    try:
        info = pltpu.get_tpu_info()
        cap = getattr(info, "vmem_capacity_bytes", None)
        if cap:
            return int(cap)
    except Exception:
        pass
    return 64 << 20      # conservative (v7x per-TensorCore)


def _choose_c_tile(C_pad, H, W, PH, PW, itemsize, vmem_cap, max_c_tile=None):
    """Largest multiple-of-128 divisor of C_pad whose double-buffered blocks fit."""
    budget = vmem_cap // 2          # leave half of VMEM for compiler scratch etc.
    for c in range(C_pad, 127, -128):
        if C_pad % c:
            continue
        if max_c_tile is not None and c > max_c_tile:
            continue
        if 2 * (H * W + PH * PW) * c * itemsize <= budget:
            return c
    # TODO(synk): add an H-tiling grid axis when even a 128-lane block is too big.
    return 128


def roi_pool_pallas(imgs, rois, output_size, spatial_scale=1.0, max_c_tile=None):
    N, C, H, W = imgs.shape
    PH, PW = output_size
    K = rois.shape[0]

    batch_idx, hstart, hend, wstart, wend = _compute_bins(
        rois, spatial_scale, PH, PW, H, W)
    # NOTE: invalid ROI batch indices are silently clamped to a valid image so a
    # bad ROI cannot trigger an out-of-range block DMA.
    batch_idx = jnp.clip(batch_idx, 0, N - 1)

    # Sort ROIs by batch index so consecutive grid steps reuse the resident
    # image block.  Outputs are written directly to their original slots via
    # the prefetch-driven output index_map (no post-kernel unsort gather).
    order = jnp.argsort(batch_idx).astype(jnp.int32)   # sorted pos -> orig slot
    batch_idx_s = batch_idx[order]
    hstart_s = hstart[order].reshape(-1)               # [K*PH], 1-D compact SMEM
    hend_s = hend[order].reshape(-1)
    wstart_s = wstart[order].reshape(-1)
    wend_s = wend[order].reshape(-1)

    # Channels on the lane axis (NHWC); pad C to a lane-dense multiple of 128.
    imgs_nhwc = jnp.transpose(imgs, (0, 2, 3, 1))      # [N, H, W, C]
    c_pad = -(-C // 128) * 128
    if c_pad != C:
        imgs_nhwc = jnp.pad(imgs_nhwc,
                            ((0, 0), (0, 0), (0, 0), (0, c_pad - C)))

    itemsize = jnp.dtype(imgs.dtype).itemsize
    vmem_cap = _vmem_capacity_bytes()
    c_tile = _choose_c_tile(c_pad, H, W, PH, PW, itemsize, vmem_cap, max_c_tile)
    n_ct = c_pad // c_tile

    # Row-index plane, loaded once (constant block index): lets the kernel mask
    # the leading H axis without an in-kernel leading-dim iota.
    h_index = jnp.broadcast_to(
        jnp.arange(H, dtype=jnp.int32)[:, None, None], (H, 1, c_tile))

    # Explicit scoped-VMEM sizing (double-buffered blocks + headroom).
    img_block = H * (-(-W // 8) * 8) * c_tile * itemsize
    out_block = (-(-(PH * PW) // 8) * 8) * c_tile * itemsize
    hidx_block = H * 8 * c_tile * 4
    vmem_needed = 2 * (img_block + out_block + hidx_block) + (4 << 20)
    vmem_limit = int(min(max(vmem_needed, 32 << 20), vmem_cap))

    kernel = functools.partial(_roi_pool_kernel, H=H, W=W, PH=PH, PW=PW)
    grid_spec = pltpu.PrefetchScalarGridSpec(
        num_scalar_prefetch=6,
        grid=(n_ct, K),                                # ROI axis innermost
        in_specs=[
            pl.BlockSpec((H, 1, c_tile),
                         lambda c, r, b, hs, he, ws, we, o: (0, 0, 0)),
            pl.BlockSpec((1, H, W, c_tile),
                         lambda c, r, b, hs, he, ws, we, o: (b[r], 0, 0, c)),
        ],
        out_specs=pl.BlockSpec((1, PH * PW, c_tile),
                               lambda c, r, b, hs, he, ws, we, o: (o[r], 0, c)),
    )
    out = pl.pallas_call(
        kernel,
        out_shape=jax.ShapeDtypeStruct((K, PH * PW, c_pad), imgs.dtype),
        grid_spec=grid_spec,
        compiler_params=pltpu.CompilerParams(
            dimension_semantics=("parallel", "parallel"),
            vmem_limit_bytes=vmem_limit),
    )(batch_idx_s, hstart_s, hend_s, wstart_s, wend_s, order,
      h_index, imgs_nhwc)

    out = out[:, :, :C].reshape(K, PH, PW, C)
    return jnp.transpose(out, (0, 3, 1, 2))            # [K, C, PH, PW]


def convert_boxes_to_roi_format(boxes):
    concat = jnp.concatenate(boxes, axis=0)
    ids = jnp.concatenate(
        [jnp.full((b.shape[0], 1), i, dtype=concat.dtype)
         for i, b in enumerate(boxes)], axis=0)
    return jnp.concatenate([ids, concat], axis=1)


class RoIPoolPallas:
    """Pallas-backed equivalent of torchvision.ops.RoIPool."""

    def __init__(self, output_size, spatial_scale, max_c_tile=None):
        self.output_size = output_size
        self.spatial_scale = spatial_scale
        self.max_c_tile = max_c_tile

    def __call__(self, imgs, boxes):
        rois = convert_boxes_to_roi_format(boxes)
        return roi_pool_pallas(imgs, rois, self.output_size,
                               self.spatial_scale, self.max_c_tile)


class PoolWrapper:
    """Mirrors the PyTorch PoolWrapper(nn.Module) forward."""

    def __init__(self, pool):
        self.pool = pool

    def __call__(self, imgs, boxes):
        return self.pool(imgs, boxes)


# ---------------------------------------------------------------------------
# Pure-numpy reference (torchvision roi_pool semantics) for verification.
# ---------------------------------------------------------------------------
def _roi_pool_ref(imgs, rois, spatial_scale, PH, PW):
    def rnd(x):
        return np.floor(x + 0.5) if x >= 0 else np.ceil(x - 0.5)

    N, C, H, W = imgs.shape
    K = rois.shape[0]
    out = np.zeros((K, C, PH, PW), np.float32)
    for k in range(K):
        b = int(rois[k, 0])
        x1, y1, x2, y2 = [float(v) for v in rois[k, 1:]]
        rsw = int(rnd(x1 * spatial_scale))
        rsh = int(rnd(y1 * spatial_scale))
        rew = int(rnd(x2 * spatial_scale))
        reh = int(rnd(y2 * spatial_scale))
        roi_w = max(rew - rsw + 1, 1)
        roi_h = max(reh - rsh + 1, 1)
        bsh = roi_h / PH
        bsw = roi_w / PW
        for i in range(PH):
            hstart = min(max(int(np.floor(i * bsh)) + rsh, 0), H)
            hend = min(max(int(np.ceil((i + 1) * bsh)) + rsh, 0), H)
            for j in range(PW):
                wstart = min(max(int(np.floor(j * bsw)) + rsw, 0), W)
                wend = min(max(int(np.ceil((j + 1) * bsw)) + rsw, 0), W)
                if hend <= hstart or wend <= wstart:
                    out[k, :, i, j] = 0.0
                else:
                    out[k, :, i, j] = imgs[b, :, hstart:hend,
                                           wstart:wend].max(axis=(1, 2))
    return out


def _make_boxes(key, n, limit):
    pts = jax.random.uniform(key, (n, 4), minval=0.0, maxval=float(limit))
    x1 = jnp.minimum(pts[:, 0], pts[:, 2])
    x2 = jnp.maximum(pts[:, 0], pts[:, 2])
    y1 = jnp.minimum(pts[:, 1], pts[:, 3])
    y2 = jnp.maximum(pts[:, 1], pts[:, 3])
    return jnp.stack([x1, y1, x2, y2], axis=1)


if __name__ == "__main__":
    key = jax.random.PRNGKey(0)
    k_img, k_b0, k_b1, k2_img, k2_b0, k2_b1 = jax.random.split(key, 6)

    # ---- Test 1: small NCHW feature map (C=4 exercises the C-padding path) --
    N, C, H, W = 2, 4, 16, 16
    imgs = jax.random.normal(k_img, (N, C, H, W), dtype=jnp.float32)
    boxes = [_make_boxes(k_b0, 3, W - 1), _make_boxes(k_b1, 2, W - 1)]  # K=5

    model = PoolWrapper(RoIPoolPallas(output_size=(4, 4), spatial_scale=1.0))
    out = jax.block_until_ready(model(imgs, boxes))

    rois_np = np.asarray(convert_boxes_to_roi_format(boxes))
    ref = _roi_pool_ref(np.asarray(imgs), rois_np, 1.0, 4, 4)
    np.testing.assert_allclose(np.asarray(out), ref, atol=1e-5, rtol=1e-5)

    # ---- Test 2: C=256 with max_c_tile=128 exercises the channel-tiled grid --
    N2, C2, H2, W2 = 2, 256, 8, 8
    imgs2 = jax.random.normal(k2_img, (N2, C2, H2, W2), dtype=jnp.float32)
    boxes2 = [_make_boxes(k2_b0, 2, W2 - 1), _make_boxes(k2_b1, 2, W2 - 1)]

    model2 = PoolWrapper(RoIPoolPallas(output_size=(2, 2), spatial_scale=1.0,
                                       max_c_tile=128))
    out2 = jax.block_until_ready(model2(imgs2, boxes2))

    rois2_np = np.asarray(convert_boxes_to_roi_format(boxes2))
    ref2 = _roi_pool_ref(np.asarray(imgs2), rois2_np, 1.0, 2, 2)
    np.testing.assert_allclose(np.asarray(out2), ref2, atol=1e-5, rtol=1e-5)

    print("KERNEL_OK")
</pallas_src>

<mosaic_0001>
module attributes {stable_mosaic.version = 11 : i64} {
  func.func @_roi_pool_kernel(%arg0: i32, %arg1: i32, %arg2: memref<5xi32, #tpu.memory_space<smem>>, %arg3: memref<20xi32, #tpu.memory_space<smem>>, %arg4: memref<20xi32, #tpu.memory_space<smem>>, %arg5: memref<20xi32, #tpu.memory_space<smem>>, %arg6: memref<20xi32, #tpu.memory_space<smem>>, %arg7: memref<5xi32, #tpu.memory_space<smem>>, %arg8: memref<16x1x128xi32, #tpu.memory_space<vmem>>, %arg9: memref<1x16x16x128xf32, #tpu.memory_space<vmem>>, %arg10: memref<1x16x128xf32, #tpu.memory_space<vmem>>) attributes {dimension_semantics = [#tpu.dimension_semantics<parallel>, #tpu.dimension_semantics<parallel>], iteration_bounds = array<i64: 1, 5>, scalar_prefetch = 6 : i64, scratch_operands = 0 : i64, tpu.core_type = #tpu.core_type<tc>, window_params = [{pipeline_mode = #tpu.pipeline_mode<synchronous>, transform_indices = @transform_0, window_bounds = array<i64: 16, 1, 128>}, {transform_indices = @transform_1, window_bounds = array<i64: 1, 16, 16, 128>}, {transform_indices = @transform_2, window_bounds = array<i64: 1, 16, 128>}]} {
    %c0 = arith.constant 0 : index
    %c0_0 = arith.constant 0 : index
    %c0_1 = arith.constant 0 : index
    %c0_2 = arith.constant 0 : index
    %0 = vector.load %arg9[%c0, %c0_0, %c0_1, %c0_2] : memref<1x16x16x128xf32, #tpu.memory_space<vmem>>, vector<1x16x16x128xf32>
    %1 = vector.shape_cast %0 : vector<1x16x16x128xf32> to vector<16x16x128xf32>
    %c0_3 = arith.constant 0 : index
    %c0_4 = arith.constant 0 : index
    %c0_5 = arith.constant 0 : index
    %2 = vector.load %arg8[%c0_3, %c0_4, %c0_5] : memref<16x1x128xi32, #tpu.memory_space<vmem>>, vector<16x1x128xi32>
    %3 = tpu.iota {dimensions = array<i32: 0>} : vector<16x1xi32>
    %4 = tpu.iota {dimensions = array<i32: 0>} : vector<4x1xi32>
    %c4_i32 = arith.constant 4 : i32
    %5 = arith.muli %arg1, %c4_i32 : i32
    %c0_i32 = arith.constant 0 : i32
    %6 = arith.addi %5, %c0_i32 : i32
    %7 = arith.index_cast %6 : i32 to index
    %8 = memref.load %arg3[%7] : memref<20xi32, #tpu.memory_space<smem>>
    %c4_i32_6 = arith.constant 4 : i32
    %9 = arith.muli %arg1, %c4_i32_6 : i32
    %c0_i32_7 = arith.constant 0 : i32
    %10 = arith.addi %9, %c0_i32_7 : i32
    %11 = arith.index_cast %10 : i32 to index
    %12 = memref.load %arg4[%11] : memref<20xi32, #tpu.memory_space<smem>>
    %13 = arith.cmpi sle, %12, %8 : i32
    %14 = vector.broadcast %8 : i32 to vector<16x1x128xi32>
    %15 = arith.cmpi sge, %2, %14 : vector<16x1x128xi32>
    %16 = vector.broadcast %12 : i32 to vector<16x1x128xi32>
    %17 = arith.cmpi slt, %2, %16 : vector<16x1x128xi32>
    %18 = arith.andi %15, %17 : vector<16x1x128xi1>
    %cst = arith.constant 0xFF800000 : f32
    %19 = vector.shape_cast %18 : vector<16x1x128xi1> to vector<16x1x128xi1>
    %20 = vector.broadcast %19 : vector<16x1x128xi1> to vector<16x16x128xi1>
    %21 = vector.broadcast %cst : f32 to vector<16x16x128xf32>
    %22 = arith.select %20, %1, %21 : vector<16x16x128xi1>, vector<16x16x128xf32>
    %cst_8 = arith.constant dense<0xFF800000> : vector<16x128xf32>
    %23 = vector.multi_reduction <maximumf>, %22, %cst_8 [0] : vector<16x16x128xf32> to vector<16x128xf32>
    %cst_9 = arith.constant 0.000000e+00 : f32
    %24 = vector.broadcast %cst_9 : f32 to vector<4x128xf32>
    %c4_i32_10 = arith.constant 4 : i32
    %25 = arith.muli %arg1, %c4_i32_10 : i32
    %c0_i32_11 = arith.constant 0 : i32
    %26 = arith.addi %25, %c0_i32_11 : i32
    %27 = arith.index_cast %26 : i32 to index
    %28 = memref.load %arg5[%27] : memref<20xi32, #tpu.memory_space<smem>>
    %c4_i32_12 = arith.constant 4 : i32
    %29 = arith.muli %arg1, %c4_i32_12 : i32
    %c0_i32_13 = arith.constant 0 : i32
    %30 = arith.addi %29, %c0_i32_13 : i32
    %31 = arith.index_cast %30 : i32 to index
    %32 = memref.load %arg6[%31] : memref<20xi32, #tpu.memory_space<smem>>
    %33 = vector.broadcast %28 : i32 to vector<16x1xi32>
    %34 = arith.cmpi sge, %3, %33 : vector<16x1xi32>
    %35 = vector.broadcast %32 : i32 to vector<16x1xi32>
    %36 = arith.cmpi slt, %3, %35 : vector<16x1xi32>
    %37 = arith.andi %34, %36 : vector<16x1xi1>
    %cst_14 = arith.constant 0xFF800000 : f32
    %38 = vector.shape_cast %37 : vector<16x1xi1> to vector<16x1xi1>
    %39 = vector.broadcast %38 : vector<16x1xi1> to vector<16x128xi1>
    %40 = vector.broadcast %cst_14 : f32 to vector<16x128xf32>
    %41 = arith.select %39, %23, %40 : vector<16x128xi1>, vector<16x128xf32>
    %cst_15 = arith.constant dense<0xFF800000> : vector<128xf32>
    %42 = vector.multi_reduction <maximumf>, %41, %cst_15 [0] : vector<16x128xf32> to vector<128xf32>
    %43 = vector.shape_cast %42 : vector<128xf32> to vector<1x128xf32>
    %44 = arith.cmpi sle, %32, %28 : i32
    %45 = arith.ori %13, %44 : i1
    %cst_16 = arith.constant 0.000000e+00 : f32
    %46 = vector.broadcast %cst_16 : f32 to vector<1x128xf32>
    %47 = arith.select %45, %46, %43 : vector<1x128xf32>
    %c0_i32_17 = arith.constant 0 : i32
    %48 = vector.broadcast %c0_i32_17 : i32 to vector<4x1xi32>
    %49 = arith.cmpi eq, %4, %48 : vector<4x1xi32>
    %50 = vector.shape_cast %49 : vector<4x1xi1> to vector<4x1xi1>
    %51 = vector.broadcast %50 : vector<4x1xi1> to vector<4x128xi1>
    %52 = vector.shape_cast %47 : vector<1x128xf32> to vector<1x128xf32>
    %53 = vector.broadcast %52 : vector<1x128xf32> to vector<4x128xf32>
    %54 = arith.select %51, %53, %24 : vector<4x128xi1>, vector<4x128xf32>
    %c4_i32_18 = arith.constant 4 : i32
    %55 = arith.muli %arg1, %c4_i32_18 : i32
    %c1_i32 = arith.constant 1 : i32
    %56 = arith.addi %55, %c1_i32 : i32
    %57 = arith.index_cast %56 : i32 to index
    %58 = memref.load %arg5[%57] : memref<20xi32, #tpu.memory_space<smem>>
    %c4_i32_19 = arith.constant 4 : i32
    %59 = arith.muli %arg1, %c4_i32_19 : i32
    %c1_i32_20 = arith.constant 1 : i32
    %60 = arith.addi %59, %c1_i32_20 : i32
    %61 = arith.index_cast %60 : i32 to index
    %62 = memref.load %arg6[%61] : memref<20xi32, #tpu.memory_space<smem>>
    %63 = vector.broadcast %58 : i32 to vector<16x1xi32>
    %64 = arith.cmpi sge, %3, %63 : vector<16x1xi32>
    %65 = vector.broadcast %62 : i32 to vector<16x1xi32>
    %66 = arith.cmpi slt, %3, %65 : vector<16x1xi32>
    %67 = arith.andi %64, %66 : vector<16x1xi1>
    %cst_21 = arith.constant 0xFF800000 : f32
    %68 = vector.shape_cast %67 : vector<16x1xi1> to vector<16x1xi1>
    %69 = vector.broadcast %68 : vector<16x1xi1> to vector<16x128xi1>
    %70 = vector.broadcast %cst_21 : f32 to vector<16x128xf32>
    %71 = arith.select %69, %23, %70 : vector<16x128xi1>, vector<16x128xf32>
    %cst_22 = arith.constant dense<0xFF800000> : vector<128xf32>
    %72 = vector.multi_reduction <maximumf>, %71, %cst_22 [0] : vector<16x128xf32> to vector<128xf32>
    %73 = vector.shape_cast %72 : vector<128xf32> to vector<1x128xf32>
    %74 = arith.cmpi sle, %62, %58 : i32
    %75 = arith.ori %13, %74 : i1
    %cst_23 = arith.constant 0.000000e+00 : f32
    %76 = vector.broadcast %cst_23 : f32 to vector<1x128xf32>
    %77 = arith.select %75, %76, %73 : vector<1x128xf32>
    %c1_i32_24 = arith.constant 1 : i32
    %78 = vector.broadcast %c1_i32_24 : i32 to vector<4x1xi32>
    %79 = arith.cmpi eq, %4, %78 : vector<4x1xi32>
    %80 = vector.shape_cast %79 : vector<4x1xi1> to vector<4x1xi1>
    %81 = vector.broadcast %80 : vector<4x1xi1> to vector<4x128xi1>
    %82 = vector.shape_cast %77 : vector<1x128xf32> to vector<1x128xf32>
    %83 = vector.broadcast %82 : vector<1x128xf32> to vector<4x128xf32>
    %84 = arith.select %81, %83, %54 : vector<4x128xi1>, vector<4x128xf32>
    %c4_i32_25 = arith.constant 4 : i32
    %85 = arith.muli %arg1, %c4_i32_25 : i32
    %c2_i32 = arith.constant 2 : i32
    %86 = arith.addi %85, %c2_i32 : i32
    %87 = arith.index_cast %86 : i32 to index
    %88 = memref.load %arg5[%87] : memref<20xi32, #tpu.memory_space<smem>>
    %c4_i32_26 = arith.constant 4 : i32
    %89 = arith.muli %arg1, %c4_i32_26 : i32
    %c2_i32_27 = arith.constant 2 : i32
    %90 = arith.addi %89, %c2_i32_27 : i32
    %91 = arith.index_cast %90 : i32 to index
    %92 = memref.load %arg6[%91] : memref<20xi32, #tpu.memory_space<smem>>
    %93 = vector.broadcast %88 : i32 to vector<16x1xi32>
    %94 = arith.cmpi sge, %3, %93 : vector<16x1xi32>
    %95 = vector.broadcast %92 : i32 to vector<16x1xi32>
    %96 = arith.cmpi slt, %3, %95 : vector<16x1xi32>
    %97 = arith.andi %94, %96 : vector<16x1xi1>
    %cst_28 = arith.constant 0xFF800000 : f32
    %98 = vector.shape_cast %97 : vector<16x1xi1> to vector<16x1xi1>
    %99 = vector.broadcast %98 : vector<16x1xi1> to vector<16x128xi1>
    %100 = vector.broadcast %cst_28 : f32 to vector<16x128xf32>
    %101 = arith.select %99, %23, %100 : vector<16x128xi1>, vector<16x128xf32>
    %cst_29 = arith.constant dense<0xFF800000> : vector<128xf32>
    %102 = vector.multi_reduction <maximumf>, %101, %cst_29 [0] : vector<16x128xf32> to vector<128xf32>
    %103 = vector.shape_cast %102 : vector<128xf32> to vector<1x128xf32>
    %104 = arith.cmpi sle, %92, %88 : i32
    %105 = arith.ori %13, %104 : i1
    %cst_30 = arith.constant 0.000000e+00 : f32
    %106 = vector.broadcast %cst_30 : f32 to vector<1x128xf32>
    %107 = arith.select %105, %106, %103 : vector<1x128xf32>
    %c2_i32_31 = arith.constant 2 : i32
    %108 = vector.broadcast %c2_i32_31 : i32 to vector<4x1xi32>
    %109 = arith.cmpi eq, %4, %108 : vector<4x1xi32>
    %110 = vector.shape_cast %109 : vector<4x1xi1> to vector<4x1xi1>
    %111 = vector.broadcast %110 : vector<4x1xi1> to vector<4x128xi1>
    %112 = vector.shape_cast %107 : vector<1x128xf32> to vector<1x128xf32>
    %113 = vector.broadcast %112 : vector<1x128xf32> to vector<4x128xf32>
    %114 = arith.select %111, %113, %84 : vector<4x128xi1>, vector<4x128xf32>
    %c4_i32_32 = arith.constant 4 : i32
    %115 = arith.muli %arg1, %c4_i32_32 : i32
    %c3_i32 = arith.constant 3 : i32
    %116 = arith.addi %115, %c3_i32 : i32
    %117 = arith.index_cast %116 : i32 to index
    %118 = memref.load %arg5[%117] : memref<20xi32, #tpu.memory_space<smem>>
    %c4_i32_33 = arith.constant 4 : i32
    %119 = arith.muli %arg1, %c4_i32_33 : i32
    %c3_i32_34 = arith.constant 3 : i32
    %120 = arith.addi %119, %c3_i32_34 : i32
    %121 = arith.index_cast %120 : i32 to index
    %122 = memref.load %arg6[%121] : memref<20xi32, #tpu.memory_space<smem>>
    %123 = vector.broadcast %118 : i32 to vector<16x1xi32>
    %124 = arith.cmpi sge, %3, %123 : vector<16x1xi32>
    %125 = vector.broadcast %122 : i32 to vector<16x1xi32>
    %126 = arith.cmpi slt, %3, %125 : vector<16x1xi32>
    %127 = arith.andi %124, %126 : vector<16x1xi1>
    %cst_35 = arith.constant 0xFF800000 : f32
    %128 = vector.shape_cast %127 : vector<16x1xi1> to vector<16x1xi1>
    %129 = vector.broadcast %128 : vector<16x1xi1> to vector<16x128xi1>
    %130 = vector.broadcast %cst_35 : f32 to vector<16x128xf32>
    %131 = arith.select %129, %23, %130 : vector<16x128xi1>, vector<16x128xf32>
    %cst_36 = arith.constant dense<0xFF800000> : vector<128xf32>
    %132 = vector.multi_reduction <maximumf>, %131, %cst_36 [0] : vector<16x128xf32> to vector<128xf32>
    %133 = vector.shape_cast %132 : vector<128xf32> to vector<1x128xf32>
    %134 = arith.cmpi sle, %122, %118 : i32
    %135 = arith.ori %13, %134 : i1
    %cst_37 = arith.constant 0.000000e+00 : f32
    %136 = vector.broadcast %cst_37 : f32 to vector<1x128xf32>
    %137 = arith.select %135, %136, %133 : vector<1x128xf32>
    %c3_i32_38 = arith.constant 3 : i32
    %138 = vector.broadcast %c3_i32_38 : i32 to vector<4x1xi32>
    %139 = arith.cmpi eq, %4, %138 : vector<4x1xi32>
    %140 = vector.shape_cast %139 : vector<4x1xi1> to vector<4x1xi1>
    %141 = vector.broadcast %140 : vector<4x1xi1> to vector<4x128xi1>
    %142 = vector.shape_cast %137 : vector<1x128xf32> to vector<1x128xf32>
    %143 = vector.broadcast %142 : vector<1x128xf32> to vector<4x128xf32>
    %144 = arith.select %141, %143, %114 : vector<4x128xi1>, vector<4x128xf32>
    %c0_39 = arith.constant 0 : index
    %c0_40 = arith.constant 0 : index
    %c0_41 = arith.constant 0 : index
    %145 = vector.load %arg10[%c0_39, %c0_40, %c0_41] : memref<1x16x128xf32, #tpu.memory_space<vmem>>, vector<1x4x128xf32>
    %146 = vector.shape_cast %145 : vector<1x4x128xf32> to vector<4x128xf32>
    %147 = vector.shape_cast %144 : vector<4x128xf32> to vector<1x4x128xf32>
    tpu.vector_store %arg10[%c0_39, %c0_40, %c0_41], %147 {strides = array<i32>} : memref<1x16x128xf32, #tpu.memory_space<vmem>>, vector<1x4x128xf32>,
    %c4_i32_42 = arith.constant 4 : i32
    %148 = arith.muli %arg1, %c4_i32_42 : i32
    %c1_i32_43 = arith.constant 1 : i32
    %149 = arith.addi %148, %c1_i32_43 : i32
    %150 = arith.index_cast %149 : i32 to index
    %151 = memref.load %arg3[%150] : memref<20xi32, #tpu.memory_space<smem>>
    %c4_i32_44 = arith.constant 4 : i32
    %152 = arith.muli %arg1, %c4_i32_44 : i32
    %c1_i32_45 = arith.constant 1 : i32
    %153 = arith.addi %152, %c1_i32_45 : i32
    %154 = arith.index_cast %153 : i32 to index
    %155 = memref.load %arg4[%154] : memref<20xi32, #tpu.memory_space<smem>>
    %156 = arith.cmpi sle, %155, %151 : i32
    %157 = vector.broadcast %151 : i32 to vector<16x1x128xi32>
    %158 = arith.cmpi sge, %2, %157 : vector<16x1x128xi32>
    %159 = vector.broadcast %155 : i32 to vector<16x1x128xi32>
    %160 = arith.cmpi slt, %2, %159 : vector<16x1x128xi32>
    %161 = arith.andi %158, %160 : vector<16x1x128xi1>
    %cst_46 = arith.constant 0xFF800000 : f32
    %162 = vector.shape_cast %161 : vector<16x1x128xi1> to vector<16x1x128xi1>
    %163 = vector.broadcast %162 : vector<16x1x128xi1> to vector<16x16x128xi1>
    %164 = vector.broadcast %cst_46 : f32 to vector<16x16x128xf32>
    %165 = arith.select %163, %1, %164 : vector<16x16x128xi1>, vector<16x16x128xf32>
    %cst_47 = arith.constant dense<0xFF800000> : vector<16x128xf32>
    %166 = vector.multi_reduction <maximumf>, %165, %cst_47 [0] : vector<16x16x128xf32> to vector<16x128xf32>
    %cst_48 = arith.constant 0.000000e+00 : f32
    %167 = vector.broadcast %cst_48 : f32 to vector<4x128xf32>
    %c4_i32_49 = arith.constant 4 : i32
    %168 = arith.muli %arg1, %c4_i32_49 : i32
    %c0_i32_50 = arith.constant 0 : i32
    %169 = arith.addi %168, %c0_i32_50 : i32
    %170 = arith.index_cast %169 : i32 to index
    %171 = memref.load %arg5[%170] : memref<20xi32, #tpu.memory_space<smem>>
    %c4_i32_51 = arith.constant 4 : i32
    %172 = arith.muli %arg1, %c4_i32_51 : i32
    %c0_i32_52 = arith.constant 0 : i32
    %173 = arith.addi %172, %c0_i32_52 : i32
    %174 = arith.index_cast %173 : i32 to index
    %175 = memref.load %arg6[%174] : memref<20xi32, #tpu.memory_space<smem>>
    %176 = vector.broadcast %171 : i32 to vector<16x1xi32>
    %177 = arith.cmpi sge, %3, %176 : vector<16x1xi32>
    %178 = vector.broadcast %175 : i32 to vector<16x1xi32>
    %179 = arith.cmpi slt, %3, %178 : vector<16x1xi32>
    %180 = arith.andi %177, %179 : vector<16x1xi1>
    %cst_53 = arith.constant 0xFF800000 : f32
    %181 = vector.shape_cast %180 : vector<16x1xi1> to vector<16x1xi1>
    %182 = vector.broadcast %181 : vector<16x1xi1> to vector<16x128xi1>
    %183 = vector.broadcast %cst_53 : f32 to vector<16x128xf32>
    %184 = arith.select %182, %166, %183 : vector<16x128xi1>, vector<16x128xf32>
    %cst_54 = arith.constant dense<0xFF800000> : vector<128xf32>
    %185 = vector.multi_reduction <maximumf>, %184, %cst_54 [0] : vector<16x128xf32> to vector<128xf32>
    %186 = vector.shape_cast %185 : vector<128xf32> to vector<1x128xf32>
    %187 = arith.cmpi sle, %175, %171 : i32
    %188 = arith.ori %156, %187 : i1
    %cst_55 = arith.constant 0.000000e+00 : f32
    %189 = vector.broadcast %cst_55 : f32 to vector<1x128xf32>
    %190 = arith.select %188, %189, %186 : vector<1x128xf32>
    %c0_i32_56 = arith.constant 0 : i32
    %191 = vector.broadcast %c0_i32_56 : i32 to vector<4x1xi32>
    %192 = arith.cmpi eq, %4, %191 : vector<4x1xi32>
    %193 = vector.shape_cast %192 : vector<4x1xi1> to vector<4x1xi1>
    %194 = vector.broadcast %193 : vector<4x1xi1> to vector<4x128xi1>
    %195 = vector.shape_cast %190 : vector<1x128xf32> to vector<1x128xf32>
    %196 = vector.broadcast %195 : vector<1x128xf32> to vector<4x128xf32>
    %197 = arith.select %194, %196, %167 : vector<4x128xi1>, vector<4x128xf32>
    %c4_i32_57 = arith.constant 4 : i32
    %198 = arith.muli %arg1, %c4_i32_57 : i32
    %c1_i32_58 = arith.constant 1 : i32
    %199 = arith.addi %198, %c1_i32_58 : i32
    %200 = arith.index_cast %199 : i32 to index
    %201 = memref.load %arg5[%200] : memref<20xi32, #tpu.memory_space<smem>>
    %c4_i32_59 = arith.constant 4 : i32
    %202 = arith.muli %arg1, %c4_i32_59 : i32
    %c1_i32_60 = arith.constant 1 : i32
    %203 = arith.addi %202, %c1_i32_60 : i32
    %204 = arith.index_cast %203 : i32 to index
    %205 = memref.load %arg6[%204] : memref<20xi32, #tpu.memory_space<smem>>
    %206 = vector.broadcast %201 : i32 to vector<16x1xi32>
    %207 = arith.cmpi sge, %3, %206 : vector<16x1xi32>
    %208 = vector.broadcast %205 : i32 to vector<16x1xi32>
    %209 = arith.cmpi slt, %3, %208 : vector<16x1xi32>
    %210 = arith.andi %207, %209 : vector<16x1xi1>
    %cst_61 = arith.constant 0xFF800000 : f32
    %211 = vector.shape_cast %210 : vector<16x1xi1> to vector<16x1xi1>
    %212 = vector.broadcast %211 : vector<16x1xi1> to vector<16x128xi1>
    %213 = vector.broadcast %cst_61 : f32 to vector<16x128xf32>
    %214 = arith.select %212, %166, %213 : vector<16x128xi1>, vector<16x128xf32>
    %cst_62 = arith.constant dense<0xFF800000> : vector<128xf32>
    %215 = vector.multi_reduction <maximumf>, %214, %cst_62 [0] : vector<16x128xf32> to vector<128xf32>
    %216 = vector.shape_cast %215 : vector<128xf32> to vector<1x128xf32>
    %217 = arith.cmpi sle, %205, %201 : i32
    %218 = arith.ori %156, %217 : i1
    %cst_63 = arith.constant 0.000000e+00 : f32
    %219 = vector.broadcast %cst_63 : f32 to vector<1x128xf32>
    %220 = arith.select %218, %219, %216 : vector<1x128xf32>
    %c1_i32_64 = arith.constant 1 : i32
    %221 = vector.broadcast %c1_i32_64 : i32 to vector<4x1xi32>
    %222 = arith.cmpi eq, %4, %221 : vector<4x1xi32>
    %223 = vector.shape_cast %222 : vector<4x1xi1> to vector<4x1xi1>
    %224 = vector.broadcast %223 : vector<4x1xi1> to vector<4x128xi1>
    %225 = vector.shape_cast %220 : vector<1x128xf32> to vector<1x128xf32>
    %226 = vector.broadcast %225 : vector<1x128xf32> to vector<4x128xf32>
    %227 = arith.select %224, %226, %197 : vector<4x128xi1>, vector<4x128xf32>
    %c4_i32_65 = arith.constant 4 : i32
    %228 = arith.muli %arg1, %c4_i32_65 : i32
    %c2_i32_66 = arith.constant 2 : i32
    %229 = arith.addi %228, %c2_i32_66 : i32
    %230 = arith.index_cast %229 : i32 to index
    %231 = memref.load %arg5[%230] : memref<20xi32, #tpu.memory_space<smem>>
    %c4_i32_67 = arith.constant 4 : i32
    %232 = arith.muli %arg1, %c4_i32_67 : i32
    %c2_i32_68 = arith.constant 2 : i32
    %233 = arith.addi %232, %c2_i32_68 : i32
    %234 = arith.index_cast %233 : i32 to index
    %235 = memref.load %arg6[%234] : memref<20xi32, #tpu.memory_space<smem>>
    %236 = vector.broadcast %231 : i32 to vector<16x1xi32>
    %237 = arith.cmpi sge, %3, %236 : vector<16x1xi32>
    %238 = vector.broadcast %235 : i32 to vector<16x1xi32>
    %239 = arith.cmpi slt, %3, %238 : vector<16x1xi32>
    %240 = arith.andi %237, %239 : vector<16x1xi1>
    %cst_69 = arith.constant 0xFF800000 : f32
    %241 = vector.shape_cast %240 : vector<16x1xi1> to vector<16x1xi1>
    %242 = vector.broadcast %241 : vector<16x1xi1> to vector<16x128xi1>
    %243 = vector.broadcast %cst_69 : f32 to vector<16x128xf32>
    %244 = arith.select %242, %166, %243 : vector<16x128xi1>, vector<16x128xf32>
    %cst_70 = arith.constant dense<0xFF800000> : vector<128xf32>
    %245 = vector.multi_reduction <maximumf>, %244, %cst_70 [0] : vector<16x128xf32> to vector<128xf32>
    %246 = vector.shape_cast %245 : vector<128xf32> to vector<1x128xf32>
    %247 = arith.cmpi sle, %235, %231 : i32
    %248 = arith.ori %156, %247 : i1
    %cst_71 = arith.constant 0.000000e+00 : f32
    %249 = vector.broadcast %cst_71 : f32 to vector<1x128xf32>
    %250 = arith.select %248, %249, %246 : vector<1x128xf32>
    %c2_i32_72 = arith.constant 2 : i32
    %251 = vector.broadcast %c2_i32_72 : i32 to vector<4x1xi32>
    %252 = arith.cmpi eq, %4, %251 : vector<4x1xi32>
    %253 = vector.shape_cast %252 : vector<4x1xi1> to vector<4x1xi1>
    %254 = vector.broadcast %253 : vector<4x1xi1> to vector<4x128xi1>
    %255 = vector.shape_cast %250 : vector<1x128xf32> to vector<1x128xf32>
    %256 = vector.broadcast %255 : vector<1x128xf32> to vector<4x128xf32>
    %257 = arith.select %254, %256, %227 : vector<4x128xi1>, vector<4x128xf32>
    %c4_i32_73 = arith.constant 4 : i32
    %258 = arith.muli %arg1, %c4_i32_73 : i32
    %c3_i32_74 = arith.constant 3 : i32
    %259 = arith.addi %258, %c3_i32_74 : i32
    %260 = arith.index_cast %259 : i32 to index
    %261 = memref.load %arg5[%260] : memref<20xi32, #tpu.memory_space<smem>>
    %c4_i32_75 = arith.constant 4 : i32
    %262 = arith.muli %arg1, %c4_i32_75 : i32
    %c3_i32_76 = arith.constant 3 : i32
    %263 = arith.addi %262, %c3_i32_76 : i32
    %264 = arith.index_cast %263 : i32 to index
    %265 = memref.load %arg6[%264] : memref<20xi32, #tpu.memory_space<smem>>
    %266 = vector.broadcast %261 : i32 to vector<16x1xi32>
    %267 = arith.cmpi sge, %3, %266 : vector<16x1xi32>
    %268 = vector.broadcast %265 : i32 to vector<16x1xi32>
    %269 = arith.cmpi slt, %3, %268 : vector<16x1xi32>
    %270 = arith.andi %267, %269 : vector<16x1xi1>
    %cst_77 = arith.constant 0xFF800000 : f32
    %271 = vector.shape_cast %270 : vector<16x1xi1> to vector<16x1xi1>
    %272 = vector.broadcast %271 : vector<16x1xi1> to vector<16x128xi1>
    %273 = vector.broadcast %cst_77 : f32 to vector<16x128xf32>
    %274 = arith.select %272, %166, %273 : vector<16x128xi1>, vector<16x128xf32>
    %cst_78 = arith.constant dense<0xFF800000> : vector<128xf32>
    %275 = vector.multi_reduction <maximumf>, %274, %cst_78 [0] : vector<16x128xf32> to vector<128xf32>
    %276 = vector.shape_cast %275 : vector<128xf32> to vector<1x128xf32>
    %277 = arith.cmpi sle, %265, %261 : i32
    %278 = arith.ori %156, %277 : i1
    %cst_79 = arith.constant 0.000000e+00 : f32
    %279 = vector.broadcast %cst_79 : f32 to vector<1x128xf32>
    %280 = arith.select %278, %279, %276 : vector<1x128xf32>
    %c3_i32_80 = arith.constant 3 : i32
    %281 = vector.broadcast %c3_i32_80 : i32 to vector<4x1xi32>
    %282 = arith.cmpi eq, %4, %281 : vector<4x1xi32>
    %283 = vector.shape_cast %282 : vector<4x1xi1> to vector<4x1xi1>
    %284 = vector.broadcast %283 : vector<4x1xi1> to vector<4x128xi1>
    %285 = vector.shape_cast %280 : vector<1x128xf32> to vector<1x128xf32>
    %286 = vector.broadcast %285 : vector<1x128xf32> to vector<4x128xf32>
    %287 = arith.select %284, %286, %257 : vector<4x128xi1>, vector<4x128xf32>
    %c0_81 = arith.constant 0 : index
    %c4 = arith.constant 4 : index
    %c0_82 = arith.constant 0 : index
    %288 = vector.load %arg10[%c0_81, %c4, %c0_82] : memref<1x16x128xf32, #tpu.memory_space<vmem>>, vector<1x4x128xf32>
    %289 = vector.shape_cast %288 : vector<1x4x128xf32> to vector<4x128xf32>
    %290 = vector.shape_cast %287 : vector<4x128xf32> to vector<1x4x128xf32>
    tpu.vector_store %arg10[%c0_81, %c4, %c0_82], %290 {strides = array<i32>} : memref<1x16x128xf32, #tpu.memory_space<vmem>>, vector<1x4x128xf32>,
    %c4_i32_83 = arith.constant 4 : i32
    %291 = arith.muli %arg1, %c4_i32_83 : i32
    %c2_i32_84 = arith.constant 2 : i32
    %292 = arith.addi %291, %c2_i32_84 : i32
    %293 = arith.index_cast %292 : i32 to index
    %294 = memref.load %arg3[%293] : memref<20xi32, #tpu.memory_space<smem>>
    %c4_i32_85 = arith.constant 4 : i32
    %295 = arith.muli %arg1, %c4_i32_85 : i32
    %c2_i32_86 = arith.constant 2 : i32
    %296 = arith.addi %295, %c2_i32_86 : i32
    %297 = arith.index_cast %296 : i32 to index
    %298 = memref.load %arg4[%297] : memref<20xi32, #tpu.memory_space<smem>>
    %299 = arith.cmpi sle, %298, %294 : i32
    %300 = vector.broadcast %294 : i32 to vector<16x1x128xi32>
    %301 = arith.cmpi sge, %2, %300 : vector<16x1x128xi32>
    %302 = vector.broadcast %298 : i32 to vector<16x1x128xi32>
    %303 = arith.cmpi slt, %2, %302 : vector<16x1x128xi32>
    %304 = arith.andi %301, %303 : vector<16x1x128xi1>
    %cst_87 = arith.constant 0xFF800000 : f32
    %305 = vector.shape_cast %304 : vector<16x1x128xi1> to vector<16x1x128xi1>
    %306 = vector.broadcast %305 : vector<16x1x128xi1> to vector<16x16x128xi1>
    %307 = vector.broadcast %cst_87 : f32 to vector<16x16x128xf32>
    %308 = arith.select %306, %1, %307 : vector<16x16x128xi1>, vector<16x16x128xf32>
    %cst_88 = arith.constant dense<0xFF800000> : vector<16x128xf32>
    %309 = vector.multi_reduction <maximumf>, %308, %cst_88 [0] : vector<16x16x128xf32> to vector<16x128xf32>
    %cst_89 = arith.constant 0.000000e+00 : f32
    %310 = vector.broadcast %cst_89 : f32 to vector<4x128xf32>
    %c4_i32_90 = arith.constant 4 : i32
    %311 = arith.muli %arg1, %c4_i32_90 : i32
    %c0_i32_91 = arith.constant 0 : i32
    %312 = arith.addi %311, %c0_i32_91 : i32
    %313 = arith.index_cast %312 : i32 to index
    %314 = memref.load %arg5[%313] : memref<20xi32, #tpu.memory_space<smem>>
    %c4_i32_92 = arith.constant 4 : i32
    %315 = arith.muli %arg1, %c4_i32_92 : i32
    %c0_i32_93 = arith.constant 0 : i32
    %316 = arith.addi %315, %c0_i32_93 : i32
    %317 = arith.index_cast %316 : i32 to index
    %318 = memref.load %arg6[%317] : memref<20xi32, #tpu.memory_space<smem>>
    %319 = vector.broadcast %314 : i32 to vector<16x1xi32>
    %320 = arith.cmpi sge, %3, %319 : vector<16x1xi32>
    %321 = vector.broadcast %318 : i32 to vector<16x1xi32>
    %322 = arith.cmpi slt, %3, %321 : vector<16x1xi32>
    %323 = arith.andi %320, %322 : vector<16x1xi1>
    %cst_94 = arith.constant 0xFF800000 : f32
    %324 = vector.shape_cast %323 : vector<16x1xi1> to vector<16x1xi1>
    %325 = vector.broadcast %324 : vector<16x1xi1> to vector<16x128xi1>
    %326 = vector.broadcast %cst_94 : f32 to vector<16x128xf32>
    %327 = arith.select %325, %309, %326 : vector<16x128xi1>, vector<16x128xf32>
    %cst_95 = arith.constant dense<0xFF800000> : vector<128xf32>
    %328 = vector.multi_reduction <maximumf>, %327, %cst_95 [0] : vector<16x128xf32> to vector<128xf32>
    %329 = vector.shape_cast %328 : vector<128xf32> to vector<1x128xf32>
    %330 = arith.cmpi sle, %318, %314 : i32
    %331 = arith.ori %299, %330 : i1
    %cst_96 = arith.constant 0.000000e+00 : f32
    %332 = vector.broadcast %cst_96 : f32 to vector<1x128xf32>
    %333 = arith.select %331, %332, %329 : vector<1x128xf32>
    %c0_i32_97 = arith.constant 0 : i32
    %334 = vector.broadcast %c0_i32_97 : i32 to vector<4x1xi32>
    %335 = arith.cmpi eq, %4, %334 : vector<4x1xi32>
    %336 = vector.shape_cast %335 : vector<4x1xi1> to vector<4x1xi1>
    %337 = vector.broadcast %336 : vector<4x1xi1> to vector<4x128xi1>
    %338 = vector.shape_cast %333 : vector<1x128xf32> to vector<1x128xf32>
    %339 = vector.broadcast %338 : vector<1x128xf32> to vector<4x128xf32>
    %340 = arith.select %337, %339, %310 : vector<4x128xi1>, vector<4x128xf32>
    %c4_i32_98 = arith.constant 4 : i32
    %341 = arith.muli %arg1, %c4_i32_98 : i32
    %c1_i32_99 = arith.constant 1 : i32
    %342 = arith.addi %341, %c1_i32_99 : i32
    %343 = arith.index_cast %342 : i32 to index
    %344 = memref.load %arg5[%343] : memref<20xi32, #tpu.memory_space<smem>>
    %c4_i32_100 = arith.constant 4 : i32
    %345 = arith.muli %arg1, %c4_i32_100 : i32
    %c1_i32_101 = arith.constant 1 : i32
    %346 = arith.addi %345, %c1_i32_101 : i32
    %347 = arith.index_cast %346 : i32 to index
    %348 = memref.load %arg6[%347] : memref<20xi32, #tpu.memory_space<smem>>
    %349 = vector.broadcast %344 : i32 to vector<16x1xi32>
    %350 = arith.cmpi sge, %3, %349 : vector<16x1xi32>
    %351 = vector.broadcast %348 : i32 to vector<16x1xi32>
    %352 = arith.cmpi slt, %3, %351 : vector<16x1xi32>
    %353 = arith.andi %350, %352 : vector<16x1xi1>
    %cst_102 = arith.constant 0xFF800000 : f32
    %354 = vector.shape_cast %353 : vector<16x1xi1> to vector<16x1xi1>
    %355 = vector.broadcast %354 : vector<16x1xi1> to vector<16x128xi1>
    %356 = vector.broadcast %cst_102 : f32 to vector<16x128xf32>
    %357 = arith.select %355, %309, %356 : vector<16x128xi1>, vector<16x128xf32>
    %cst_103 = arith.constant dense<0xFF800000> : vector<128xf32>
    %358 = vector.multi_reduction <maximumf>, %357, %cst_103 [0] : vector<16x128xf32> to vector<128xf32>
    %359 = vector.shape_cast %358 : vector<128xf32> to vector<1x128xf32>
    %360 = arith.cmpi sle, %348, %344 : i32
    %361 = arith.ori %299, %360 : i1
    %cst_104 = arith.constant 0.000000e+00 : f32
    %362 = vector.broadcast %cst_104 : f32 to vector<1x128xf32>
    %363 = arith.select %361, %362, %359 : vector<1x128xf32>
    %c1_i32_105 = arith.constant 1 : i32
    %364 = vector.broadcast %c1_i32_105 : i32 to vector<4x1xi32>
    %365 = arith.cmpi eq, %4, %364 : vector<4x1xi32>
    %366 = vector.shape_cast %365 : vector<4x1xi1> to vector<4x1xi1>
    %367 = vector.broadcast %366 : vector<4x1xi1> to vector<4x128xi1>
    %368 = vector.shape_cast %363 : vector<1x128xf32> to vector<1x128xf32>
    %369 = vector.broadcast %368 : vector<1x128xf32> to vector<4x128xf32>
    %370 = arith.select %367, %369, %340 : vector<4x128xi1>, vector<4x128xf32>
    %c4_i32_106 = arith.constant 4 : i32
    %371 = arith.muli %arg1, %c4_i32_106 : i32
    %c2_i32_107 = arith.constant 2 : i32
    %372 = arith.addi %371, %c2_i32_107 : i32
    %373 = arith.index_cast %372 : i32 to index
    %374 = memref.load %arg5[%373] : memref<20xi32, #tpu.memory_space<smem>>
    %c4_i32_108 = arith.constant 4 : i32
    %375 = arith.muli %arg1, %c4_i32_108 : i32
    %c2_i32_109 = arith.constant 2 : i32
    %376 = arith.addi %375, %c2_i32_109 : i32
    %377 = arith.index_cast %376 : i32 to index
    %378 = memref.load %arg6[%377] : memref<20xi32, #tpu.memory_space<smem>>
    %379 = vector.broadcast %374 : i32 to vector<16x1xi32>
    %380 = arith.cmpi sge, %3, %379 : vector<16x1xi32>
    %381 = vector.broadcast %378 : i32 to vector<16x1xi32>
    %382 = arith.cmpi slt, %3, %381 : vector<16x1xi32>
    %383 = arith.andi %380, %382 : vector<16x1xi1>
    %cst_110 = arith.constant 0xFF800000 : f32
    %384 = vector.shape_cast %383 : vector<16x1xi1> to vector<16x1xi1>
    %385 = vector.broadcast %384 : vector<16x1xi1> to vector<16x128xi1>
    %386 = vector.broadcast %cst_110 : f32 to vector<16x128xf32>
    %387 = arith.select %385, %309, %386 : vector<16x128xi1>, vector<16x128xf32>
    %cst_111 = arith.constant dense<0xFF800000> : vector<128xf32>
    %388 = vector.multi_reduction <maximumf>, %387, %cst_111 [0] : vector<16x128xf32> to vector<128xf32>
    %389 = vector.shape_cast %388 : vector<128xf32> to vector<1x128xf32>
    %390 = arith.cmpi sle, %378, %374 : i32
    %391 = arith.ori %299, %390 : i1
    %cst_112 = arith.constant 0.000000e+00 : f32
    %392 = vector.broadcast %cst_112 : f32 to vector<1x128xf32>
    %393 = arith.select %391, %392, %389 : vector<1x128xf32>
    %c2_i32_113 = arith.constant 2 : i32
    %394 = vector.broadcast %c2_i32_113 : i32 to vector<4x1xi32>
    %395 = arith.cmpi eq, %4, %394 : vector<4x1xi32>
    %396 = vector.shape_cast %395 : vector<4x1xi1> to vector<4x1xi1>
    %397 = vector.broadcast %396 : vector<4x1xi1> to vector<4x128xi1>
    %398 = vector.shape_cast %393 : vector<1x128xf32> to vector<1x128xf32>
    %399 = vector.broadcast %398 : vector<1x128xf32> to vector<4x128xf32>
    %400 = arith.select %397, %399, %370 : vector<4x128xi1>, vector<4x128xf32>
    %c4_i32_114 = arith.constant 4 : i32
    %401 = arith.muli %arg1, %c4_i32_114 : i32
    %c3_i32_115 = arith.constant 3 : i32
    %402 = arith.addi %401, %c3_i32_115 : i32
    %403 = arith.index_cast %402 : i32 to index
    %404 = memref.load %arg5[%403] : memref<20xi32, #tpu.memory_space<smem>>
    %c4_i32_116 = arith.constant 4 : i32
    %405 = arith.muli %arg1, %c4_i32_116 : i32
    %c3_i32_117 = arith.constant 3 : i32
    %406 = arith.addi %405, %c3_i32_117 : i32
    %407 = arith.index_cast %406 : i32 to index
    %408 = memref.load %arg6[%407] : memref<20xi32, #tpu.memory_space<smem>>
    %409 = vector.broadcast %404 : i32 to vector<16x1xi32>
    %410 = arith.cmpi sge, %3, %409 : vector<16x1xi32>
    %411 = vector.broadcast %408 : i32 to vector<16x1xi32>
    %412 = arith.cmpi slt, %3, %411 : vector<16x1xi32>
    %413 = arith.andi %410, %412 : vector<16x1xi1>
    %cst_118 = arith.constant 0xFF800000 : f32
    %414 = vector.shape_cast %413 : vector<16x1xi1> to vector<16x1xi1>
    %415 = vector.broadcast %414 : vector<16x1xi1> to vector<16x128xi1>
    %416 = vector.broadcast %cst_118 : f32 to vector<16x128xf32>
    %417 = arith.select %415, %309, %416 : vector<16x128xi1>, vector<16x128xf32>
    %cst_119 = arith.constant dense<0xFF800000> : vector<128xf32>
    %418 = vector.multi_reduction <maximumf>, %417, %cst_119 [0] : vector<16x128xf32> to vector<128xf32>
    %419 = vector.shape_cast %418 : vector<128xf32> to vector<1x128xf32>
    %420 = arith.cmpi sle, %408, %404 : i32
    %421 = arith.ori %299, %420 : i1
    %cst_120 = arith.constant 0.000000e+00 : f32
    %422 = vector.broadcast %cst_120 : f32 to vector<1x128xf32>
    %423 = arith.select %421, %422, %419 : vector<1x128xf32>
    %c3_i32_121 = arith.constant 3 : i32
    %424 = vector.broadcast %c3_i32_121 : i32 to vector<4x1xi32>
    %425 = arith.cmpi eq, %4, %424 : vector<4x1xi32>
    %426 = vector.shape_cast %425 : vector<4x1xi1> to vector<4x1xi1>
    %427 = vector.broadcast %426 : vector<4x1xi1> to vector<4x128xi1>
    %428 = vector.shape_cast %423 : vector<1x128xf32> to vector<1x128xf32>
    %429 = vector.broadcast %428 : vector<1x128xf32> to vector<4x128xf32>
    %430 = arith.select %427, %429, %400 : vector<4x128xi1>, vector<4x128xf32>
    %c0_122 = arith.constant 0 : index
    %c8 = arith.constant 8 : index
    %c0_123 = arith.constant 0 : index
    %431 = vector.load %arg10[%c0_122, %c8, %c0_123] : memref<1x16x128xf32, #tpu.memory_space<vmem>>, vector<1x4x128xf32>
    %432 = vector.shape_cast %431 : vector<1x4x128xf32> to vector<4x128xf32>
    %433 = vector.shape_cast %430 : vector<4x128xf32> to vector<1x4x128xf32>
    tpu.vector_store %arg10[%c0_122, %c8, %c0_123], %433 {strides = array<i32>} : memref<1x16x128xf32, #tpu.memory_space<vmem>>, vector<1x4x128xf32>,
    %c4_i32_124 = arith.constant 4 : i32
    %434 = arith.muli %arg1, %c4_i32_124 : i32
    %c3_i32_125 = arith.constant 3 : i32
    %435 = arith.addi %434, %c3_i32_125 : i32
    %436 = arith.index_cast %435 : i32 to index
    %437 = memref.load %arg3[%436] : memref<20xi32, #tpu.memory_space<smem>>
    %c4_i32_126 = arith.constant 4 : i32
    %438 = arith.muli %arg1, %c4_i32_126 : i32
    %c3_i32_127 = arith.constant 3 : i32
    %439 = arith.addi %438, %c3_i32_127 : i32
    %440 = arith.index_cast %439 : i32 to index
    %441 = memref.load %arg4[%440] : memref<20xi32, #tpu.memory_space<smem>>
    %442 = arith.cmpi sle, %441, %437 : i32
    %443 = vector.broadcast %437 : i32 to vector<16x1x128xi32>
    %444 = arith.cmpi sge, %2, %443 : vector<16x1x128xi32>
    %445 = vector.broadcast %441 : i32 to vector<16x1x128xi32>
    %446 = arith.cmpi slt, %2, %445 : vector<16x1x128xi32>
    %447 = arith.andi %444, %446 : vector<16x1x128xi1>
    %cst_128 = arith.constant 0xFF800000 : f32
    %448 = vector.shape_cast %447 : vector<16x1x128xi1> to vector<16x1x128xi1>
    %449 = vector.broadcast %448 : vector<16x1x128xi1> to vector<16x16x128xi1>
    %450 = vector.broadcast %cst_128 : f32 to vector<16x16x128xf32>
    %451 = arith.select %449, %1, %450 : vector<16x16x128xi1>, vector<16x16x128xf32>
    %cst_129 = arith.constant dense<0xFF800000> : vector<16x128xf32>
    %452 = vector.multi_reduction <maximumf>, %451, %cst_129 [0] : vector<16x16x128xf32> to vector<16x128xf32>
    %cst_130 = arith.constant 0.000000e+00 : f32
    %453 = vector.broadcast %cst_130 : f32 to vector<4x128xf32>
    %c4_i32_131 = arith.constant 4 : i32
    %454 = arith.muli %arg1, %c4_i32_131 : i32
    %c0_i32_132 = arith.constant 0 : i32
    %455 = arith.addi %454, %c0_i32_132 : i32
    %456 = arith.index_cast %455 : i32 to index
    %457 = memref.load %arg5[%456] : memref<20xi32, #tpu.memory_space<smem>>
    %c4_i32_133 = arith.constant 4 : i32
    %458 = arith.muli %arg1, %c4_i32_133 : i32
    %c0_i32_134 = arith.constant 0 : i32
    %459 = arith.addi %458, %c0_i32_134 : i32
    %460 = arith.index_cast %459 : i32 to index
    %461 = memref.load %arg6[%460] : memref<20xi32, #tpu.memory_space<smem>>
    %462 = vector.broadcast %457 : i32 to vector<16x1xi32>
    %463 = arith.cmpi sge, %3, %462 : vector<16x1xi32>
    %464 = vector.broadcast %461 : i32 to vector<16x1xi32>
    %465 = arith.cmpi slt, %3, %464 : vector<16x1xi32>
    %466 = arith.andi %463, %465 : vector<16x1xi1>
    %cst_135 = arith.constant 0xFF800000 : f32
    %467 = vector.shape_cast %466 : vector<16x1xi1> to vector<16x1xi1>
    %468 = vector.broadcast %467 : vector<16x1xi1> to vector<16x128xi1>
    %469 = vector.broadcast %cst_135 : f32 to vector<16x128xf32>
    %470 = arith.select %468, %452, %469 : vector<16x128xi1>, vector<16x128xf32>
    %cst_136 = arith.constant dense<0xFF800000> : vector<128xf32>
    %471 = vector.multi_reduction <maximumf>, %470, %cst_136 [0] : vector<16x128xf32> to vector<128xf32>
    %472 = vector.shape_cast %471 : vector<128xf32> to vector<1x128xf32>
    %473 = arith.cmpi sle, %461, %457 : i32
    %474 = arith.ori %442, %473 : i1
    %cst_137 = arith.constant 0.000000e+00 : f32
    %475 = vector.broadcast %cst_137 : f32 to vector<1x128xf32>
    %476 = arith.select %474, %475, %472 : vector<1x128xf32>
    %c0_i32_138 = arith.constant 0 : i32
    %477 = vector.broadcast %c0_i32_138 : i32 to vector<4x1xi32>
    %478 = arith.cmpi eq, %4, %477 : vector<4x1xi32>
    %479 = vector.shape_cast %478 : vector<4x1xi1> to vector<4x1xi1>
    %480 = vector.broadcast %479 : vector<4x1xi1> to vector<4x128xi1>
    %481 = vector.shape_cast %476 : vector<1x128xf32> to vector<1x128xf32>
    %482 = vector.broadcast %481 : vector<1x128xf32> to vector<4x128xf32>
    %483 = arith.select %480, %482, %453 : vector<4x128xi1>, vector<4x128xf32>
    %c4_i32_139 = arith.constant 4 : i32
    %484 = arith.muli %arg1, %c4_i32_139 : i32
    %c1_i32_140 = arith.constant 1 : i32
    %485 = arith.addi %484, %c1_i32_140 : i32
    %486 = arith.index_cast %485 : i32 to index
    %487 = memref.load %arg5[%486] : memref<20xi32, #tpu.memory_space<smem>>
    %c4_i32_141 = arith.constant 4 : i32
    %488 = arith.muli %arg1, %c4_i32_141 : i32
    %c1_i32_142 = arith.constant 1 : i32
    %489 = arith.addi %488, %c1_i32_142 : i32
    %490 = arith.index_cast %489 : i32 to index
    %491 = memref.load %arg6[%490] : memref<20xi32, #tpu.memory_space<smem>>
    %492 = vector.broadcast %487 : i32 to vector<16x1xi32>
    %493 = arith.cmpi sge, %3, %492 : vector<16x1xi32>
    %494 = vector.broadcast %491 : i32 to vector<16x1xi32>
    %495 = arith.cmpi slt, %3, %494 : vector<16x1xi32>
    %496 = arith.andi %493, %495 : vector<16x1xi1>
    %cst_143 = arith.constant 0xFF800000 : f32
    %497 = vector.shape_cast %496 : vector<16x1xi1> to vector<16x1xi1>
    %498 = vector.broadcast %497 : vector<16x1xi1> to vector<16x128xi1>
    %499 = vector.broadcast %cst_143 : f32 to vector<16x128xf32>
    %500 = arith.select %498, %452, %499 : vector<16x128xi1>, vector<16x128xf32>
    %cst_144 = arith.constant dense<0xFF800000> : vector<128xf32>
    %501 = vector.multi_reduction <maximumf>, %500, %cst_144 [0] : vector<16x128xf32> to vector<128xf32>
    %502 = vector.shape_cast %501 : vector<128xf32> to vector<1x128xf32>
    %503 = arith.cmpi sle, %491, %487 : i32
    %504 = arith.ori %442, %503 : i1
    %cst_145 = arith.constant 0.000000e+00 : f32
    %505 = vector.broadcast %cst_145 : f32 to vector<1x128xf32>
    %506 = arith.select %504, %505, %502 : vector<1x128xf32>
    %c1_i32_146 = arith.constant 1 : i32
    %507 = vector.broadcast %c1_i32_146 : i32 to vector<4x1xi32>
    %508 = arith.cmpi eq, %4, %507 : vector<4x1xi32>
    %509 = vector.shape_cast %508 : vector<4x1xi1> to vector<4x1xi1>
    %510 = vector.broadcast %509 : vector<4x1xi1> to vector<4x128xi1>
    %511 = vector.shape_cast %506 : vector<1x128xf32> to vector<1x128xf32>
    %512 = vector.broadcast %511 : vector<1x128xf32> to vector<4x128xf32>
    %513 = arith.select %510, %512, %483 : vector<4x128xi1>, vector<4x128xf32>
    %c4_i32_147 = arith.constant 4 : i32
    %514 = arith.muli %arg1, %c4_i32_147 : i32
    %c2_i32_148 = arith.constant 2 : i32
    %515 = arith.addi %514, %c2_i32_148 : i32
    %516 = arith.index_cast %515 : i32 to index
    %517 = memref.load %arg5[%516] : memref<20xi32, #tpu.memory_space<smem>>
    %c4_i32_149 = arith.constant 4 : i32
    %518 = arith.muli %arg1, %c4_i32_149 : i32
    %c2_i32_150 = arith.constant 2 : i32
    %519 = arith.addi %518, %c2_i32_150 : i32
    %520 = arith.index_cast %519 : i32 to index
    %521 = memref.load %arg6[%520] : memref<20xi32, #tpu.memory_space<smem>>
    %522 = vector.broadcast %517 : i32 to vector<16x1xi32>
    %523 = arith.cmpi sge, %3, %522 : vector<16x1xi32>
    %524 = vector.broadcast %521 : i32 to vector<16x1xi32>
    %525 = arith.cmpi slt, %3, %524 : vector<16x1xi32>
    %526 = arith.andi %523, %525 : vector<16x1xi1>
    %cst_151 = arith.constant 0xFF800000 : f32
    %527 = vector.shape_cast %526 : vector<16x1xi1> to vector<16x1xi1>
    %528 = vector.broadcast %527 : vector<16x1xi1> to vector<16x128xi1>
    %529 = vector.broadcast %cst_151 : f32 to vector<16x128xf32>
    %530 = arith.select %528, %452, %529 : vector<16x128xi1>, vector<16x128xf32>
    %cst_152 = arith.constant dense<0xFF800000> : vector<128xf32>
    %531 = vector.multi_reduction <maximumf>, %530, %cst_152 [0] : vector<16x128xf32> to vector<128xf32>
    %532 = vector.shape_cast %531 : vector<128xf32> to vector<1x128xf32>
    %533 = arith.cmpi sle, %521, %517 : i32
    %534 = arith.ori %442, %533 : i1
    %cst_153 = arith.constant 0.000000e+00 : f32
    %535 = vector.broadcast %cst_153 : f32 to vector<1x128xf32>
    %536 = arith.select %534, %535, %532 : vector<1x128xf32>
    %c2_i32_154 = arith.constant 2 : i32
    %537 = vector.broadcast %c2_i32_154 : i32 to vector<4x1xi32>
    %538 = arith.cmpi eq, %4, %537 : vector<4x1xi32>
    %539 = vector.shape_cast %538 : vector<4x1xi1> to vector<4x1xi1>
    %540 = vector.broadcast %539 : vector<4x1xi1> to vector<4x128xi1>
    %541 = vector.shape_cast %536 : vector<1x128xf32> to vector<1x128xf32>
    %542 = vector.broadcast %541 : vector<1x128xf32> to vector<4x128xf32>
    %543 = arith.select %540, %542, %513 : vector<4x128xi1>, vector<4x128xf32>
    %c4_i32_155 = arith.constant 4 : i32
    %544 = arith.muli %arg1, %c4_i32_155 : i32
    %c3_i32_156 = arith.constant 3 : i32
    %545 = arith.addi %544, %c3_i32_156 : i32
    %546 = arith.index_cast %545 : i32 to index
    %547 = memref.load %arg5[%546] : memref<20xi32, #tpu.memory_space<smem>>
    %c4_i32_157 = arith.constant 4 : i32
    %548 = arith.muli %arg1, %c4_i32_157 : i32
    %c3_i32_158 = arith.constant 3 : i32
    %549 = arith.addi %548, %c3_i32_158 : i32
    %550 = arith.index_cast %549 : i32 to index
    %551 = memref.load %arg6[%550] : memref<20xi32, #tpu.memory_space<smem>>
    %552 = vector.broadcast %547 : i32 to vector<16x1xi32>
    %553 = arith.cmpi sge, %3, %552 : vector<16x1xi32>
    %554 = vector.broadcast %551 : i32 to vector<16x1xi32>
    %555 = arith.cmpi slt, %3, %554 : vector<16x1xi32>
    %556 = arith.andi %553, %555 : vector<16x1xi1>
    %cst_159 = arith.constant 0xFF800000 : f32
    %557 = vector.shape_cast %556 : vector<16x1xi1> to vector<16x1xi1>
    %558 = vector.broadcast %557 : vector<16x1xi1> to vector<16x128xi1>
    %559 = vector.broadcast %cst_159 : f32 to vector<16x128xf32>
    %560 = arith.select %558, %452, %559 : vector<16x128xi1>, vector<16x128xf32>
    %cst_160 = arith.constant dense<0xFF800000> : vector<128xf32>
    %561 = vector.multi_reduction <maximumf>, %560, %cst_160 [0] : vector<16x128xf32> to vector<128xf32>
    %562 = vector.shape_cast %561 : vector<128xf32> to vector<1x128xf32>
    %563 = arith.cmpi sle, %551, %547 : i32
    %564 = arith.ori %442, %563 : i1
    %cst_161 = arith.constant 0.000000e+00 : f32
    %565 = vector.broadcast %cst_161 : f32 to vector<1x128xf32>
    %566 = arith.select %564, %565, %562 : vector<1x128xf32>
    %c3_i32_162 = arith.constant 3 : i32
    %567 = vector.broadcast %c3_i32_162 : i32 to vector<4x1xi32>
    %568 = arith.cmpi eq, %4, %567 : vector<4x1xi32>
    %569 = vector.shape_cast %568 : vector<4x1xi1> to vector<4x1xi1>
    %570 = vector.broadcast %569 : vector<4x1xi1> to vector<4x128xi1>
    %571 = vector.shape_cast %566 : vector<1x128xf32> to vector<1x128xf32>
    %572 = vector.broadcast %571 : vector<1x128xf32> to vector<4x128xf32>
    %573 = arith.select %570, %572, %543 : vector<4x128xi1>, vector<4x128xf32>
    %c0_163 = arith.constant 0 : index
    %c12 = arith.constant 12 : index
    %c0_164 = arith.constant 0 : index
    %574 = vector.load %arg10[%c0_163, %c12, %c0_164] : memref<1x16x128xf32, #tpu.memory_space<vmem>>, vector<1x4x128xf32>
    %575 = vector.shape_cast %574 : vector<1x4x128xf32> to vector<4x128xf32>
    %576 = vector.shape_cast %573 : vector<4x128xf32> to vector<1x4x128xf32>
    tpu.vector_store %arg10[%c0_163, %c12, %c0_164], %576 {strides = array<i32>} : memref<1x16x128xf32, #tpu.memory_space<vmem>>, vector<1x4x128xf32>,
    return
  }
  func.func @transform_0(%arg0: i32, %arg1: i32, %arg2: memref<5xi32, #tpu.memory_space<smem>>, %arg3: memref<20xi32, #tpu.memory_space<smem>>, %arg4: memref<20xi32, #tpu.memory_space<smem>>, %arg5: memref<20xi32, #tpu.memory_space<smem>>, %arg6: memref<20xi32, #tpu.memory_space<smem>>, %arg7: memref<5xi32, #tpu.memory_space<smem>>) -> (i32, i32, i32) {
    %c0_i32 = arith.constant 0 : i32
    %c0_i32_0 = arith.constant 0 : i32
    %c0_i32_1 = arith.constant 0 : i32
    %c0_i32_2 = arith.constant 0 : i32
    return %c0_i32, %c0_i32_0, %c0_i32_1 : i32, i32, i32
  }
  func.func @transform_1(%arg0: i32, %arg1: i32, %arg2: memref<5xi32, #tpu.memory_space<smem>>, %arg3: memref<20xi32, #tpu.memory_space<smem>>, %arg4: memref<20xi32, #tpu.memory_space<smem>>, %arg5: memref<20xi32, #tpu.memory_space<smem>>, %arg6: memref<20xi32, #tpu.memory_space<smem>>, %arg7: memref<5xi32, #tpu.memory_space<smem>>) -> (i32, i32, i32, i32) {
    %0 = arith.index_cast %arg1 : i32 to index
    %1 = memref.load %arg2[%0] : memref<5xi32, #tpu.memory_space<smem>>
    %c0_i32 = arith.constant 0 : i32
    %c0_i32_0 = arith.constant 0 : i32
    %c0_i32_1 = arith.constant 0 : i32
    return %1, %c0_i32, %c0_i32_0, %arg0 : i32, i32, i32, i32
  }
  func.func @transform_2(%arg0: i32, %arg1: i32, %arg2: memref<5xi32, #tpu.memory_space<smem>>, %arg3: memref<20xi32, #tpu.memory_space<smem>>, %arg4: memref<20xi32, #tpu.memory_space<smem>>, %arg5: memref<20xi32, #tpu.memory_space<smem>>, %arg6: memref<20xi32, #tpu.memory_space<smem>>, %arg7: memref<5xi32, #tpu.memory_space<smem>>) -> (i32, i32, i32) {
    %0 = arith.index_cast %arg1 : i32 to index
    %1 = memref.load %arg7[%0] : memref<5xi32, #tpu.memory_space<smem>>
    %c0_i32 = arith.constant 0 : i32
    %c0_i32_0 = arith.constant 0 : i32
    return %1, %c0_i32, %arg0 : i32, i32, i32
  }
}

</mosaic_0001>

<llo_original>
// kernel: tpu_custom_call.1
$region0: #{tpu_custom_call.1}
  #allocation0 [shape = 'u32[]', space=smem, size = 0x4, offset = 0x4, fixed_abs, tag = 'smem constant byte address 0x4 - core index']
  #allocation1 [shape = 'u32[144,128]{1,0:T(1,128)}', space=vmem, size = 0x12000, scoped, tag = 'internal scratch']
  #allocation2 [shape = 's32[1]{0}', space=sflag, size = 0x4, scoped, tag = 'scoped memory for tpu_custom_call.1']
  #allocation3 [shape = 'u8[512]{0}', space=smem, size = 0x200, scoped, tag = 'prefetched SMEM operand 0']
  #allocation4 [shape = 'u8[512]{0}', space=smem, size = 0x200, scoped, tag = 'prefetched SMEM operand 1']
  #allocation5 [shape = 'u8[512]{0}', space=smem, size = 0x200, scoped, tag = 'prefetched SMEM operand 2']
  #allocation6 [shape = 'u8[512]{0}', space=smem, size = 0x200, scoped, tag = 'prefetched SMEM operand 3']
  #allocation7 [shape = 'u8[512]{0}', space=smem, size = 0x200, scoped, tag = 'prefetched SMEM operand 4']
  #allocation8 [shape = 'u8[512]{0}', space=smem, size = 0x200, scoped, tag = 'prefetched SMEM operand 5']
  %s0 = inlined_call_operand.hbm [shape: s32[5], index: 0, kind: input, shape index: {}]
  %s1 = inlined_call_operand.vmem [shape: s32[20], index: 1, kind: input, shape index: {}]
  %s2 = inlined_call_operand.vmem [shape: s32[20], index: 2, kind: input, shape index: {}]
  %s3 = inlined_call_operand.vmem [shape: s32[20], index: 3, kind: input, shape index: {}]
  %s4 = inlined_call_operand.vmem [shape: s32[20], index: 4, kind: input, shape index: {}]
  %s5 = inlined_call_operand.vmem [shape: s32[5], index: 5, kind: input, shape index: {}]
  %s6 = inlined_call_operand.vmem [shape: s32[16,1,128], index: 6, kind: input, shape index: {}]
  %s7 = inlined_call_operand.hbm [shape: f32[2,16,16,128], index: 7, kind: input, shape index: {}]
  %s8 = inlined_call_operand.hbm [shape: f32[5,16,128], index: 8, kind: output, shape index: {}]
  %s9 = sld [smem:[#allocation0]]
  $region45: #{tpu_custom_call.1} parent=0
    _
  %s11 = ssub.s32 1, %s9
  %s12 = scalar_select 0, %s11, %s9
  %14 = dma.hbm_to_smem %s0, 16, [#allocation3], [#allocation2]
  %s15 = sshll.u32 %s1, 4
  %s16 = int_to_ptr.vmem [resolvable:$true] %s15
  %18 = dma.vmem_to_smem %s16, 16, [#allocation4], [#allocation2]
  %s19 = sshll.u32 %s2, 4
  %s20 = int_to_ptr.vmem [resolvable:$true] %s19
  %22 = dma.vmem_to_smem %s20, 16, [#allocation5], [#allocation2]
  %s23 = sshll.u32 %s3, 4
  %s24 = int_to_ptr.vmem [resolvable:$true] %s23
  %26 = dma.vmem_to_smem %s24, 16, [#allocation6], [#allocation2]
  %s27 = sshll.u32 %s4, 4
  %s28 = int_to_ptr.vmem [resolvable:$true] %s27
  %30 = dma.vmem_to_smem %s28, 16, [#allocation7], [#allocation2]
  %s31 = sshll.u32 %s5, 4
  %s32 = int_to_ptr.vmem [resolvable:$true] %s31
  %34 = dma.vmem_to_smem %s32, 16, [#allocation8], [#allocation2]
  %35 = dma.done [#allocation2], 96
  %36 = sfence
  $region1: #{tpu_custom_call.1} parent=0
    #allocation9 [shape = 'u8[262144]{0}', space=vmem, size = 0x40000, scoped, tag = 'input window, operand 7']
    #allocation10 [shape = 's32[2]{0}', space=sflag, size = 0x8, scoped, tag = 'scoped memory for tpu_custom_call.1']
    #allocation11 [shape = 's32[2]{0}', space=sflag, size = 0x8, scoped, tag = 'scoped memory for tpu_custom_call.1']
    #allocation12 [shape = 'u8[16384]{0}', space=vmem, size = 0x4000, scoped, tag = 'output window, operand 0']
    %37 = vsyncpa [#allocation10], 0
    %s38 = scalar_lea.sflag [#allocation10], 1
    %39 = vsyncpa %s38, 0
    %40 = vsyncpa [#allocation11], 0
    %s41 = scalar_lea.sflag [#allocation11], 1
    %42 = vsyncpa %s41, 0
    loop: start=0, step=1, limit=7
    $region2: #{tpu_custom_call.1} parent=1 // loop_pre_header
      _
    $region3: #{tpu_custom_call.1} parent=1 // loop_header
      %s44 = sphi 0, %s48
      %p45 = scmp.ge.s32.totalorder %s44, 7
      %s51 = sphi 0, %s63
      %s52 = sphi 0, %s59
      %s53 = sphi 0, %s51
      %s54 = sphi 0, %s52
      %s55 = sphi 0, %s53
      %s56 = sphi 0, %s54
      %s64 = sphi 0, %s64
      %s66 = sphi 0, %s64
      %s67 = sphi 0, %s66
      %s81 = sphi 0, %s67
      %s91 = sphi 0, %s93
      %s94 = sphi 0, %s91
      %s95 = sphi 0, %s94
      %s111 = sphi 0, %s95
      %s121 = sphi 0, %s123
      %s124 = sphi 0, %s121
      %s125 = sphi 0, %s124
      %s141 = sphi 0, %s125
    $region4: #{tpu_custom_call.1} parent=1 // loop_header_branch
      %47 = sbr.rel (%p45) target = $region8
    $region5: #{tpu_custom_call.1} parent=1 // loop_body
      %s49 = ssub.s32 %s44, 1
      %s50 = ssub.s32 %s44, 2
      %s57 = sadd.s32 1, %s52
      %p58 = scmp.ge.s32.totalorder %s57, 5
      %s59 = scalar_select %p58, 0, %s57
      %s60 = sadd.s32 1, %s51
      %s61 = scalar_select %p58, %s60, %s51
      %p62 = scmp.ge.s32.totalorder %s61, 1
      %s63 = scalar_select %p62, 0, %s61
      %s65 = sadd.s32 %s64, 1
      %p68 = scmp.eq.s32.totalorder %s44, 4
      %p69 = scmp.ne.s32.totalorder %s64, %s66
      %p70 = scmp.eq.s32.totalorder %s44, 0
      %p71 = por %p69, %p70
      %p72 = scmp.ne.s32.totalorder %s64, %s66
      %p73 = scmp.eq.s32.totalorder %s49, 4
      %p74 = por %p72, %p73
      %p75 = scmp.ne.s32.totalorder %s66, %s67
      %p76 = scmp.eq.s32.totalorder %s49, 0
      %p77 = por %p75, %p76
      %p78 = scmp.ne.s32.totalorder %s66, %s67
      %p79 = scmp.eq.s32.totalorder %s50, 4
      %p80 = por %p78, %p79
      %p82 = scmp.ne.s32.totalorder %s67, %s81
      %p83 = scmp.eq.s32.totalorder %s50, 0
      %p84 = por %p82, %p83
      %s85 = sld [smem:[#allocation3 + %s52]]
      %s86 = sld [smem:[#allocation3 + %s59]]
      %s87 = ssub.s32 %s85, %s86
      %s88 = ssub.s32 %s51, %s63
      %s89 = sor.u32 %s87, %s88
      %p90 = scmp.eq.s32.totalorder %s89, 0
      %s92 = sadd.s32 %s91, 1
      %s93 = scalar_select %p90, %s91, %s92
      %p96 = pneg %p90
      %p97 = scmp.eq.s32.totalorder %s44, 4
      %p98 = por %p96, %p97
      %p99 = scmp.ne.s32.totalorder %s91, %s94
      %p100 = scmp.eq.s32.totalorder %s44, 0
      %p101 = por %p99, %p100
      %p102 = scmp.ne.s32.totalorder %s91, %s94
      %p103 = scmp.eq.s32.totalorder %s49, 4
      %p104 = por %p102, %p103
      %p105 = scmp.ne.s32.totalorder %s94, %s95
      %p106 = scmp.eq.s32.totalorder %s49, 0
      %p107 = por %p105, %p106
      %p108 = scmp.ne.s32.totalorder %s94, %s95
      %p109 = scmp.eq.s32.totalorder %s50, 4
      %p110 = por %p108, %p109
      %p112 = scmp.ne.s32.totalorder %s95, %s111
      %p113 = scmp.eq.s32.totalorder %s50, 0
      %p114 = por %p112, %p113
      %s115 = sld [smem:[#allocation8 + %s52]]
      %s116 = sld [smem:[#allocation8 + %s59]]
      %s117 = ssub.s32 %s115, %s116
      %s118 = ssub.s32 %s51, %s63
      %s119 = sor.u32 %s117, %s118
      %p120 = scmp.eq.s32.totalorder %s119, 0
      %s122 = sadd.s32 %s121, 1
      %s123 = scalar_select %p120, %s121, %s122
      %p126 = pneg %p120
      %p127 = scmp.eq.s32.totalorder %s44, 4
      %p128 = por %p126, %p127
      %p129 = scmp.ne.s32.totalorder %s121, %s124
      %p130 = scmp.eq.s32.totalorder %s44, 0
      %p131 = por %p129, %p130
      %p132 = scmp.ne.s32.totalorder %s121, %s124
      %p133 = scmp.eq.s32.totalorder %s49, 4
      %p134 = por %p132, %p133
      %p135 = scmp.ne.s32.totalorder %s124, %s125
      %p136 = scmp.eq.s32.totalorder %s49, 0
      %p137 = por %p135, %p136
      %p138 = scmp.ne.s32.totalorder %s124, %s125
      %p139 = scmp.eq.s32.totalorder %s50, 4
      %p140 = por %p138, %p139
      %p142 = scmp.ne.s32.totalorder %s125, %s141
      %p143 = scmp.eq.s32.totalorder %s50, 0
      %p144 = por %p142, %p143
      %p145 = scmp.le.s32.totalorder 1, %s44
      %p146 = scmp.lt.s32.totalorder %s44, 6
      %p147 = pnand %p145, %p146
      %p148 = pneg %p147
      // Predicated region
      $region9: #{tpu_custom_call.1} parent=5 // pred_check
        _
      $region10: #{tpu_custom_call.1} parent=5 // pred_check_branch
        %150 = sbr.rel (%p147) target = $region12
      $region11: #{tpu_custom_call.1} parent=5 // pred_region
        %s151 = ssub.s32 %s44, 1
        // Predicated region
        $region13: #{tpu_custom_call.1} parent=11 // pred_check
          %p152 = pneg %p77
        $region14: #{tpu_custom_call.1} parent=11 // pred_check_branch
          %154 = sbr.rel (%p152) target = $region16
        $region15: #{tpu_custom_call.1} parent=11 // pred_region
          _
        $region16: #{tpu_custom_call.1} parent=11 // pred_fallthru
          _
      $region12: #{tpu_custom_call.1} parent=5 // pred_fallthru
        _
      %p155 = scmp.lt.s32.totalorder %s44, 5
      // Predicated region
      $region17: #{tpu_custom_call.1} parent=5 // pred_check
        %p156 = pneg %p155
      $region18: #{tpu_custom_call.1} parent=5 // pred_check_branch
        %158 = sbr.rel (%p156) target = $region20
      $region19: #{tpu_custom_call.1} parent=5 // pred_region
        // Predicated region
        $region21: #{tpu_custom_call.1} parent=19 // pred_check
          %p159 = pneg %p101
        $region22: #{tpu_custom_call.1} parent=19 // pred_check_branch
          %161 = sbr.rel (%p159) target = $region24
        $region23: #{tpu_custom_call.1} parent=19 // pred_region
          %s162 = sand.u32 %s91, 1
          %s163 = scalar_lea.sflag [#allocation10], %s162
          %s164 = sand.u32 %s91, 1
          %s165 = smul.addr %s164, 256
          %s166 = scalar_lea.vmem [#allocation9], %s165
          %s167 = sld [smem:[#allocation3 + %s52]]
          %s169 = ssub.s32 4096, 4096
          %170 = vsyncadd %s163, %s169
          %s171 = smul.addr %s167, 32
          %s172 = sadd.s32 %s51, %s171
          %s173 = smul.addr %s172, 128
          %s174 = scalar_lea.hbm %s7, %s173
          %s175 = sshll.u32 %s166, 4
          %s176 = int_to_ptr.vmem [resolvable:$true] %s175
          %181 = dma.hbm_to_vmem [thread:$0]  %s174, 4096, %s176, %s163, 128, 128, 8
        $region24: #{tpu_custom_call.1} parent=19 // pred_fallthru
          _
      $region20: #{tpu_custom_call.1} parent=5 // pred_fallthru
        _
      %p182 = scmp.le.s32.totalorder 1, %s44
      %p183 = scmp.lt.s32.totalorder %s44, 6
      %p184 = pnand %p182, %p183
      %p185 = pneg %p184
      // Predicated region
      $region25: #{tpu_custom_call.1} parent=5 // pred_check
        _
      $region26: #{tpu_custom_call.1} parent=5 // pred_check_branch
        %187 = sbr.rel (%p184) target = $region28
      $region27: #{tpu_custom_call.1} parent=5 // pred_region
        %s188 = ssub.s32 %s44, 1
        %s189 = sand.u32 %s94, 1
        %s190 = scalar_lea.sflag [#allocation10], %s189
        %s191 = sand.u32 %s94, 1
        %s192 = smul.addr %s191, 256
        %s193 = scalar_lea.vmem [#allocation9], %s192
        // Predicated region
        $region29: #{tpu_custom_call.1} parent=27 // pred_check
          %p194 = pneg %p107
        $region30: #{tpu_custom_call.1} parent=27 // pred_check_branch
          %196 = sbr.rel (%p194) target = $region32
        $region31: #{tpu_custom_call.1} parent=27 // pred_region
          %197 = dma.done %s190, 4096
        $region32: #{tpu_custom_call.1} parent=27 // pred_fallthru
          _
        %p198 = pneg %p77
        %p199 = pneg %p74
        %s200 = sand.u32 %s94, 1
        %s201 = scalar_lea.sflag [#allocation10], %s200
        %s202 = sand.u32 %s94, 1
        %s203 = smul.addr %s202, 256
        %s204 = scalar_lea.vmem [#allocation9], %s203
        %p205 = pneg %p107
        %p206 = pneg %p104
        %p207 = pneg %p137
        %p208 = pneg %p134
        %s209 = sand.u32 %s124, 1
        %s210 = scalar_lea.sflag [#allocation11], %s209
        %s211 = sand.u32 %s124, 1
        %s212 = smul.addr %s211, 16
        %s213 = scalar_lea.vmem [#allocation12], %s212
        %s214 = sld [smem:[#allocation3 + %s54]]
        %s215 = sld [smem:[#allocation8 + %s54]]
        %v216 = vld [vmem:[%s193] sm:$0xff]
        %v217 = vld [vmem:[%s193 + $0x8] sm:$0xff]
        %v218 = vld [vmem:[%s193 + $0x10] sm:$0xff]
        %v219 = vld [vmem:[%s193 + $0x18] sm:$0xff]
        %v220 = vld [vmem:[%s193 + $0x20] sm:$0xff]
        %v221 = vld [vmem:[%s193 + $0x28] sm:$0xff]
        %v222 = vld [vmem:[%s193 + $0x30] sm:$0xff]
        %v223 = vld [vmem:[%s193 + $0x38] sm:$0xff]
        %v224 = vld [vmem:[%s193 + $0x40] sm:$0xff]
        %v225 = vld [vmem:[%s193 + $0x48] sm:$0xff]
        %v226 = vld [vmem:[%s193 + $0x50] sm:$0xff]
        %v227 = vld [vmem:[%s193 + $0x58] sm:$0xff]
        %v228 = vld [vmem:[%s193 + $0x60] sm:$0xff]
        %v229 = vld [vmem:[%s193 + $0x68] sm:$0xff]
        %v230 = vld [vmem:[%s193 + $0x70] sm:$0xff]
        %v231 = vld [vmem:[%s193 + $0x78] sm:$0xff]
        %v232 = vld [vmem:[%s193 + $0x80] sm:$0xff]
        %v233 = vld [vmem:[%s193 + $0x88] sm:$0xff]
        %v234 = vld [vmem:[%s193 + $0x90] sm:$0xff]
        %v235 = vld [vmem:[%s193 + $0x98] sm:$0xff]
        %v236 = vld [vmem:[%s193 + $0xa0] sm:$0xff]
        %v237 = vld [vmem:[%s193 + $0xa8] sm:$0xff]
        %v238 = vld [vmem:[%s193 + $0xb0] sm:$0xff]
        %v239 = vld [vmem:[%s193 + $0xb8] sm:$0xff]
        %v240 = vld [vmem:[%s193 + $0xc0] sm:$0xff]
        %v241 = vld [vmem:[%s193 + $0xc8] sm:$0xff]
        %v242 = vld [vmem:[%s193 + $0xd0] sm:$0xff]
        %v243 = vld [vmem:[%s193 + $0xd8] sm:$0xff]
        %v244 = vld [vmem:[%s193 + $0xe0] sm:$0xff]
        %v245 = vld [vmem:[%s193 + $0xe8] sm:$0xff]
        %v246 = vld [vmem:[%s193 + $0xf0] sm:$0xff]
        %v247 = vld [vmem:[%s193 + $0xf8] sm:$0xff]
        %v248 = vld [vmem:[%s6] sm:$0x1]
        %v249 = vld [vmem:[%s6 + $0x1] sm:$0x1]
        %v250 = vld [vmem:[%s6 + $0x2] sm:$0x1]
        %v251 = vld [vmem:[%s6 + $0x3] sm:$0x1]
        %v252 = vld [vmem:[%s6 + $0x4] sm:$0x1]
        %v253 = vld [vmem:[%s6 + $0x5] sm:$0x1]
        %v254 = vld [vmem:[%s6 + $0x6] sm:$0x1]
        %v255 = vld [vmem:[%s6 + $0x7] sm:$0x1]
        %v256 = vld [vmem:[%s6 + $0x8] sm:$0x1]
        %v257 = vld [vmem:[%s6 + $0x9] sm:$0x1]
        %v258 = vld [vmem:[%s6 + $0xa] sm:$0x1]
        %v259 = vld [vmem:[%s6 + $0xb] sm:$0x1]
        %v260 = vld [vmem:[%s6 + $0xc] sm:$0x1]
        %v261 = vld [vmem:[%s6 + $0xd] sm:$0x1]
        %v262 = vld [vmem:[%s6 + $0xe] sm:$0x1]
        %v263 = vld [vmem:[%s6 + $0xf] sm:$0x1]
        %v264 = vlaneseq
        %v265 = vshrl.u32 %v264, 7
        %v266 = vadd.s32 %v265, 8
        %s267 = smul.u32 %s54, 4
        %s268 = sld [smem:[#allocation4 + %s267]]
        %s269 = sld [smem:[#allocation5 + %s267]]
        %p270 = scmp.le.s32.totalorder %s269, %s268
        %v271 = vstv %s268
        %vm272 = vcmp.ge.s32.totalorder %v248, %v271
        %vm273 = vcmp.ge.s32.totalorder %v249, %v271
        %vm274 = vcmp.ge.s32.totalorder %v250, %v271
        %vm275 = vcmp.ge.s32.totalorder %v251, %v271
        %vm276 = vcmp.ge.s32.totalorder %v252, %v271
        %vm277 = vcmp.ge.s32.totalorder %v253, %v271
        %vm278 = vcmp.ge.s32.totalorder %v254, %v271
        %vm279 = vcmp.ge.s32.totalorder %v255, %v271
        %vm280 = vcmp.ge.s32.totalorder %v256, %v271
        %vm281 = vcmp.ge.s32.totalorder %v257, %v271
        %vm282 = vcmp.ge.s32.totalorder %v258, %v271
        %vm283 = vcmp.ge.s32.totalorder %v259, %v271
        %vm284 = vcmp.ge.s32.totalorder %v260, %v271
        %vm285 = vcmp.ge.s32.totalorder %v261, %v271
        %vm286 = vcmp.ge.s32.totalorder %v262, %v271
        %vm287 = vcmp.ge.s32.totalorder %v263, %v271
        %v288 = vstv %s269
        %vm289 = vcmp.lt.s32.totalorder %v248, %v288
        %vm290 = vcmp.lt.s32.totalorder %v249, %v288
        %vm291 = vcmp.lt.s32.totalorder %v250, %v288
        %vm292 = vcmp.lt.s32.totalorder %v251, %v288
        %vm293 = vcmp.lt.s32.totalorder %v252, %v288
        %vm294 = vcmp.lt.s32.totalorder %v253, %v288
        %vm295 = vcmp.lt.s32.totalorder %v254, %v288
        %vm296 = vcmp.lt.s32.totalorder %v255, %v288
        %vm297 = vcmp.lt.s32.totalorder %v256, %v288
        %vm298 = vcmp.lt.s32.totalorder %v257, %v288
        %vm299 = vcmp.lt.s32.totalorder %v258, %v288
        %vm300 = vcmp.lt.s32.totalorder %v259, %v288
        %vm301 = vcmp.lt.s32.totalorder %v260, %v288
        %vm302 = vcmp.lt.s32.totalorder %v261, %v288
        %vm303 = vcmp.lt.s32.totalorder %v262, %v288
        %vm304 = vcmp.lt.s32.totalorder %v263, %v288
        %vm305 = vmand %vm272, %vm289
        %vm306 = vmand %vm273, %vm290
        %vm307 = vmand %vm274, %vm291
        %vm308 = vmand %vm275, %vm292
        %vm309 = vmand %vm276, %vm293
        %vm310 = vmand %vm277, %vm294
        %vm311 = vmand %vm278, %vm295
        %vm312 = vmand %vm279, %vm296
        %vm313 = vmand %vm280, %vm297
        %vm314 = vmand %vm281, %vm298
        %vm315 = vmand %vm282, %vm299
        %vm316 = vmand %vm283, %vm300
        %vm317 = vmand %vm284, %vm301
        %vm318 = vmand %vm285, %vm302
        %vm319 = vmand %vm286, %vm303
        %vm320 = vmand %vm287, %vm304
        %v321 = vsel %vm305, 1, 0
        %v322 = vsel %vm306, 1, 0
        %v323 = vsel %vm307, 1, 0
        %v324 = vsel %vm308, 1, 0
        %v325 = vsel %vm309, 1, 0
        %v326 = vsel %vm310, 1, 0
        %v327 = vsel %vm311, 1, 0
        %v328 = vsel %vm312, 1, 0
        %v329 = vsel %vm313, 1, 0
        %v330 = vsel %vm314, 1, 0
        %v331 = vsel %vm315, 1, 0
        %v332 = vsel %vm316, 1, 0
        %v333 = vsel %vm317, 1, 0
        %v334 = vsel %vm318, 1, 0
        %v335 = vsel %vm319, 1, 0
        %v336 = vsel %vm320, 1, 0
        %v337 = vlaneseq
        %v338 = vshrl.u32 %v337, 7
        %v339 = vsub.s32 0, %v338
        %v340 = vrot.slane %v321, %v339
        %v341 = vlaneseq
        %v342 = vshrl.u32 %v341, 7
        %v343 = vsub.s32 0, %v342
        %v344 = vrot.slane %v322, %v343
        %v345 = vlaneseq
        %v346 = vshrl.u32 %v345, 7
        %v347 = vsub.s32 0, %v346
        %v348 = vrot.slane %v323, %v347
        %v349 = vlaneseq
        %v350 = vshrl.u32 %v349, 7
        %v351 = vsub.s32 0, %v350
        %v352 = vrot.slane %v324, %v351
        %v353 = vlaneseq
        %v354 = vshrl.u32 %v353, 7
        %v355 = vsub.s32 0, %v354
        %v356 = vrot.slane %v325, %v355
        %v357 = vlaneseq
        %v358 = vshrl.u32 %v357, 7
        %v359 = vsub.s32 0, %v358
        %v360 = vrot.slane %v326, %v359
        %v361 = vlaneseq
        %v362 = vshrl.u32 %v361, 7
        %v363 = vsub.s32 0, %v362
        %v364 = vrot.slane %v327, %v363
        %v365 = vlaneseq
        %v366 = vshrl.u32 %v365, 7
        %v367 = vsub.s32 0, %v366
        %v368 = vrot.slane %v328, %v367
        %v369 = vlaneseq
        %v370 = vshrl.u32 %v369, 7
        %v371 = vsub.s32 0, %v370
        %v372 = vrot.slane %v329, %v371
        %v373 = vlaneseq
        %v374 = vshrl.u32 %v373, 7
        %v375 = vsub.s32 0, %v374
        %v376 = vrot.slane %v330, %v375
        %v377 = vlaneseq
        %v378 = vshrl.u32 %v377, 7
        %v379 = vsub.s32 0, %v378
        %v380 = vrot.slane %v331, %v379
        %v381 = vlaneseq
        %v382 = vshrl.u32 %v381, 7
        %v383 = vsub.s32 0, %v382
        %v384 = vrot.slane %v332, %v383
        %v385 = vlaneseq
        %v386 = vshrl.u32 %v385, 7
        %v387 = vsub.s32 0, %v386
        %v388 = vrot.slane %v333, %v387
        %v389 = vlaneseq
        %v390 = vshrl.u32 %v389, 7
        %v391 = vsub.s32 0, %v390
        %v392 = vrot.slane %v334, %v391
        %v393 = vlaneseq
        %v394 = vshrl.u32 %v393, 7
        %v395 = vsub.s32 0, %v394
        %v396 = vrot.slane %v335, %v395
        %v397 = vlaneseq
        %v398 = vshrl.u32 %v397, 7
        %v399 = vsub.s32 0, %v398
        %v400 = vrot.slane %v336, %v399
        %vm401 = vcmp.eq.s32.totalorder %v340, 1
        %vm402 = vcmp.eq.s32.totalorder %v344, 1
        %vm403 = vcmp.eq.s32.totalorder %v348, 1
        %vm404 = vcmp.eq.s32.totalorder %v352, 1
        %vm405 = vcmp.eq.s32.totalorder %v356, 1
        %vm406 = vcmp.eq.s32.totalorder %v360, 1
        %vm407 = vcmp.eq.s32.totalorder %v364, 1
        %vm408 = vcmp.eq.s32.totalorder %v368, 1
        %vm409 = vcmp.eq.s32.totalorder %v372, 1
        %vm410 = vcmp.eq.s32.totalorder %v376, 1
        %vm411 = vcmp.eq.s32.totalorder %v380, 1
        %vm412 = vcmp.eq.s32.totalorder %v384, 1
        %vm413 = vcmp.eq.s32.totalorder %v388, 1
        %vm414 = vcmp.eq.s32.totalorder %v392, 1
        %vm415 = vcmp.eq.s32.totalorder %v396, 1
        %vm416 = vcmp.eq.s32.totalorder %v400, 1
        %v417 = vsel %vm401, %v216, -inf
        %v418 = vsel %vm401, %v217, -inf
        %v419 = vsel %vm402, %v218, -inf
        %v420 = vsel %vm402, %v219, -inf
        %v421 = vsel %vm403, %v220, -inf
        %v422 = vsel %vm403, %v221, -inf
        %v423 = vsel %vm404, %v222, -inf
        %v424 = vsel %vm404, %v223, -inf
        %v425 = vsel %vm405, %v224, -inf
        %v426 = vsel %vm405, %v225, -inf
        %v427 = vsel %vm406, %v226, -inf
        %v428 = vsel %vm406, %v227, -inf
        %v429 = vsel %vm407, %v228, -inf
        %v430 = vsel %vm407, %v229, -inf
        %v431 = vsel %vm408, %v230, -inf
        %v432 = vsel %vm408, %v231, -inf
        %v433 = vsel %vm409, %v232, -inf
        %v434 = vsel %vm409, %v233, -inf
        %v435 = vsel %vm410, %v234, -inf
        %v436 = vsel %vm410, %v235, -inf
        %v437 = vsel %vm411, %v236, -inf
        %v438 = vsel %vm411, %v237, -inf
        %v439 = vsel %vm412, %v238, -inf
        %v440 = vsel %vm412, %v239, -inf
        %v441 = vsel %vm413, %v240, -inf
        %v442 = vsel %vm413, %v241, -inf
        %v443 = vsel %vm414, %v242, -inf
        %v444 = vsel %vm414, %v243, -inf
        %v445 = vsel %vm415, %v244, -inf
        %v446 = vsel %vm415, %v245, -inf
        %v447 = vsel %vm416, %v246, -inf
        %v448 = vsel %vm416, %v247, -inf
        %v449 = vmax.f32 %v417, %v421
        %v450 = vmax.f32 %v419, %v423
        %v451 = vmax.f32 %v449, %v425
        %v452 = vmax.f32 %v450, %v427
        %v453 = vmax.f32 %v451, %v429
        %v454 = vmax.f32 %v452, %v431
        %v455 = vmax.f32 %v453, %v433
        %v456 = vmax.f32 %v454, %v435
        %v457 = vmax.f32 %v455, %v437
        %v458 = vmax.f32 %v456, %v439
        %v459 = vmax.f32 %v457, %v441
        %v460 = vmax.f32 %v458, %v443
        %v461 = vmax.f32 %v459, %v445
        %v462 = vmax.f32 %v460, %v447
        %v463 = vmax.f32 %v461, %v462
        %v464 = vmax.f32 %v418, %v422
        %v465 = vmax.f32 %v420, %v424
        %v466 = vmax.f32 %v464, %v426
        %v467 = vmax.f32 %v465, %v428
        %v468 = vmax.f32 %v466, %v430
        %v469 = vmax.f32 %v467, %v432
        %v470 = vmax.f32 %v468, %v434
        %v471 = vmax.f32 %v469, %v436
        %v472 = vmax.f32 %v470, %v438
        %v473 = vmax.f32 %v471, %v440
        %v474 = vmax.f32 %v472, %v442
        %v475 = vmax.f32 %v473, %v444
        %v476 = vmax.f32 %v474, %v446
        %v477 = vmax.f32 %v475, %v448
        %v478 = vmax.f32 %v476, %v477
        %s479 = sld [smem:[#allocation6 + %s267]]
        %s480 = sld [smem:[#allocation7 + %s267]]
        %v481 = vstv %s479
        %vm482 = vcmp.ge.s32.totalorder %v265, %v481
        %vm483 = vcmp.ge.s32.totalorder %v266, %v481
        %v484 = vstv %s480
        %vm485 = vcmp.lt.s32.totalorder %v265, %v484
        %vm486 = vcmp.lt.s32.totalorder %v266, %v484
        %vm487 = vmand %vm482, %vm485
        %vm488 = vmand %vm483, %vm486
        %v489 = vsel %vm487, 1, 0
        %v490 = vsel %vm488, 1, 0
        %vm491 = vcmp.eq.s32.totalorder %v489, 1
        %vm492 = vcmp.eq.s32.totalorder %v490, 1
        %v493 = vsel %vm491, %v463, -inf
        %v494 = vsel %vm492, %v478, -inf
        %v495 = vmax.f32 %v493, %v494
        %v496 = vrot.slane %v495, 4
        %v497 = vmax.f32 %v495, %v496
        %v498 = vrot.slane %v497, 2
        %v499 = vmax.f32 %v497, %v498
        %v500 = vrot.slane %v499, 1
        %v501 = vmax.f32 %v499, %v500
        %p502 = scmp.le.s32.totalorder %s480, %s479
        %p503 = por %p270, %p502
        %s504 = scalar_select %p503, 1, 0
        %v505 = vstv %s504
        %vm506 = vcmp.eq.s32.totalorder %v505, 1
        %v507 = vsel %vm506, 0.0, %v501
        %vm508 = vcmp.eq.s32.totalorder %v265, 0
        %v509 = vsel %vm508, 1, 0
        %vm510 = vcmp.eq.s32.totalorder %v509, 1
        %v511 = vsel %vm510, %v507, 0.0
        %s512 = sadd.s32 %s267, 1
        %s513 = sld [smem:[#allocation6 + %s512]]
        %s514 = sld [smem:[#allocation7 + %s512]]
        %v515 = vstv %s513
        %vm516 = vcmp.ge.s32.totalorder %v265, %v515
        %vm517 = vcmp.ge.s32.totalorder %v266, %v515
        %v518 = vstv %s514
        %vm519 = vcmp.lt.s32.totalorder %v265, %v518
        %vm520 = vcmp.lt.s32.totalorder %v266, %v518
        %vm521 = vmand %vm516, %vm519
        %vm522 = vmand %vm517, %vm520
        %v523 = vsel %vm521, 1, 0
        %v524 = vsel %vm522, 1, 0
        %vm525 = vcmp.eq.s32.totalorder %v523, 1
        %vm526 = vcmp.eq.s32.totalorder %v524, 1
        %v527 = vsel %vm525, %v463, -inf
        %v528 = vsel %vm526, %v478, -inf
        %v529 = vmax.f32 %v527, %v528
        %v530 = vrot.slane %v529, 4
        %v531 = vmax.f32 %v529, %v530
        %v532 = vrot.slane %v531, 2
        %v533 = vmax.f32 %v531, %v532
        %v534 = vrot.slane %v533, 1
        %v535 = vmax.f32 %v533, %v534
        %p536 = scmp.le.s32.totalorder %s514, %s513
        %p537 = por %p270, %p536
        %s538 = scalar_select %p537, 1, 0
        %v539 = vstv %s538
        %vm540 = vcmp.eq.s32.totalorder %v539, 1
        %v541 = vsel %vm540, 0.0, %v535
        %vm542 = vcmp.eq.s32.totalorder %v265, 1
        %v543 = vsel %vm542, 1, 0
        %vm544 = vcmp.eq.s32.totalorder %v543, 1
        %v545 = vsel %vm544, %v541, %v511
        %s546 = sadd.s32 %s267, 2
        %s547 = sld [smem:[#allocation6 + %s546]]
        %s548 = sld [smem:[#allocation7 + %s546]]
        %v549 = vstv %s547
        %vm550 = vcmp.ge.s32.totalorder %v265, %v549
        %vm551 = vcmp.ge.s32.totalorder %v266, %v549
        %v552 = vstv %s548
        %vm553 = vcmp.lt.s32.totalorder %v265, %v552
        %vm554 = vcmp.lt.s32.totalorder %v266, %v552
        %vm555 = vmand %vm550, %vm553
        %vm556 = vmand %vm551, %vm554
        %v557 = vsel %vm555, 1, 0
        %v558 = vsel %vm556, 1, 0
        %vm559 = vcmp.eq.s32.totalorder %v557, 1
        %vm560 = vcmp.eq.s32.totalorder %v558, 1
        %v561 = vsel %vm559, %v463, -inf
        %v562 = vsel %vm560, %v478, -inf
        %v563 = vmax.f32 %v561, %v562
        %v564 = vrot.slane %v563, 4
        %v565 = vmax.f32 %v563, %v564
        %v566 = vrot.slane %v565, 2
        %v567 = vmax.f32 %v565, %v566
        %v568 = vrot.slane %v567, 1
        %v569 = vmax.f32 %v567, %v568
        %p570 = scmp.le.s32.totalorder %s548, %s547
        %p571 = por %p270, %p570
        %s572 = scalar_select %p571, 1, 0
        %v573 = vstv %s572
        %vm574 = vcmp.eq.s32.totalorder %v573, 1
        %v575 = vsel %vm574, 0.0, %v569
        %vm576 = vcmp.eq.s32.totalorder %v265, 2
        %v577 = vsel %vm576, 1, 0
        %vm578 = vcmp.eq.s32.totalorder %v577, 1
        %v579 = vsel %vm578, %v575, %v545
        %s580 = sadd.s32 %s267, 3
        %s581 = sld [smem:[#allocation6 + %s580]]
        %s582 = sld [smem:[#allocation7 + %s580]]
        %v583 = vstv %s581
        %vm584 = vcmp.ge.s32.totalorder %v265, %v583
        %vm585 = vcmp.ge.s32.totalorder %v266, %v583
        %v586 = vstv %s582
        %vm587 = vcmp.lt.s32.totalorder %v265, %v586
        %vm588 = vcmp.lt.s32.totalorder %v266, %v586
        %vm589 = vmand %vm584, %vm587
        %vm590 = vmand %vm585, %vm588
        %v591 = vsel %vm589, 1, 0
        %v592 = vsel %vm590, 1, 0
        %vm593 = vcmp.eq.s32.totalorder %v591, 1
        %vm594 = vcmp.eq.s32.totalorder %v592, 1
        %v595 = vsel %vm593, %v463, -inf
        %v596 = vsel %vm594, %v478, -inf
        %v597 = vmax.f32 %v595, %v596
        %v598 = vrot.slane %v597, 4
        %v599 = vmax.f32 %v597, %v598
        %v600 = vrot.slane %v599, 2
        %v601 = vmax.f32 %v599, %v600
        %v602 = vrot.slane %v601, 1
        %v603 = vmax.f32 %v601, %v602
        %p604 = scmp.le.s32.totalorder %s582, %s581
        %p605 = por %p270, %p604
        %s606 = scalar_select %p605, 1, 0
        %v607 = vstv %s606
        %vm608 = vcmp.eq.s32.totalorder %v607, 1
        %v609 = vsel %vm608, 0.0, %v603
        %vm610 = vcmp.eq.s32.totalorder %v265, 3
        %v611 = vsel %vm610, 1, 0
        %vm612 = vcmp.eq.s32.totalorder %v611, 1
        %v613 = vsel %vm612, %v609, %v579
        %614 = vst [vmem:[%s213] sm:$0xf] %v613
        %s615 = sld [smem:[#allocation4 + %s512]]
        %s616 = sld [smem:[#allocation5 + %s512]]
        %p617 = scmp.le.s32.totalorder %s616, %s615
        %v618 = vstv %s615
        %vm619 = vcmp.ge.s32.totalorder %v248, %v618
        %vm620 = vcmp.ge.s32.totalorder %v249, %v618
        %vm621 = vcmp.ge.s32.totalorder %v250, %v618
        %vm622 = vcmp.ge.s32.totalorder %v251, %v618
        %vm623 = vcmp.ge.s32.totalorder %v252, %v618
        %vm624 = vcmp.ge.s32.totalorder %v253, %v618
        %vm625 = vcmp.ge.s32.totalorder %v254, %v618
        %vm626 = vcmp.ge.s32.totalorder %v255, %v618
        %vm627 = vcmp.ge.s32.totalorder %v256, %v618
        %vm628 = vcmp.ge.s32.totalorder %v257, %v618
        %vm629 = vcmp.ge.s32.totalorder %v258, %v618
        %vm630 = vcmp.ge.s32.totalorder %v259, %v618
        %vm631 = vcmp.ge.s32.totalorder %v260, %v618
        %vm632 = vcmp.ge.s32.totalorder %v261, %v618
        %vm633 = vcmp.ge.s32.totalorder %v262, %v618
        %vm634 = vcmp.ge.s32.totalorder %v263, %v618
        %v635 = vstv %s616
        %vm636 = vcmp.lt.s32.totalorder %v248, %v635
        %vm637 = vcmp.lt.s32.totalorder %v249, %v635
        %vm638 = vcmp.lt.s32.totalorder %v250, %v635
        %vm639 = vcmp.lt.s32.totalorder %v251, %v635
        %vm640 = vcmp.lt.s32.totalorder %v252, %v635
        %vm641 = vcmp.lt.s32.totalorder %v253, %v635
        %vm642 = vcmp.lt.s32.totalorder %v254, %v635
        %vm643 = vcmp.lt.s32.totalorder %v255, %v635
        %vm644 = vcmp.lt.s32.totalorder %v256, %v635
        %vm645 = vcmp.lt.s32.totalorder %v257, %v635
        %vm646 = vcmp.lt.s32.totalorder %v258, %v635
        %vm647 = vcmp.lt.s32.totalorder %v259, %v635
        %vm648 = vcmp.lt.s32.totalorder %v260, %v635
        %vm649 = vcmp.lt.s32.totalorder %v261, %v635
        %vm650 = vcmp.lt.s32.totalorder %v262, %v635
        %vm651 = vcmp.lt.s32.totalorder %v263, %v635
        %vm652 = vmand %vm619, %vm636
        %vm653 = vmand %vm620, %vm637
        %vm654 = vmand %vm621, %vm638
        %vm655 = vmand %vm622, %vm639
        %vm656 = vmand %vm623, %vm640
        %vm657 = vmand %vm624, %vm641
        %vm658 = vmand %vm625, %vm642
        %vm659 = vmand %vm626, %vm643
        %vm660 = vmand %vm627, %vm644
        %vm661 = vmand %vm628, %vm645
        %vm662 = vmand %vm629, %vm646
        %vm663 = vmand %vm630, %vm647
        %vm664 = vmand %vm631, %vm648
        %vm665 = vmand %vm632, %vm649
        %vm666 = vmand %vm633, %vm650
        %vm667 = vmand %vm634, %vm651
        %v668 = vsel %vm652, 1, 0
        %v669 = vsel %vm653, 1, 0
        %v670 = vsel %vm654, 1, 0
        %v671 = vsel %vm655, 1, 0
        %v672 = vsel %vm656, 1, 0
        %v673 = vsel %vm657, 1, 0
        %v674 = vsel %vm658, 1, 0
        %v675 = vsel %vm659, 1, 0
        %v676 = vsel %vm660, 1, 0
        %v677 = vsel %vm661, 1, 0
        %v678 = vsel %vm662, 1, 0
        %v679 = vsel %vm663, 1, 0
        %v680 = vsel %vm664, 1, 0
        %v681 = vsel %vm665, 1, 0
        %v682 = vsel %vm666, 1, 0
        %v683 = vsel %vm667, 1, 0
        %v684 = vlaneseq
        %v685 = vshrl.u32 %v684, 7
        %v686 = vsub.s32 0, %v685
        %v687 = vrot.slane %v668, %v686
        %v688 = vlaneseq
        %v689 = vshrl.u32 %v688, 7
        %v690 = vsub.s32 0, %v689
        %v691 = vrot.slane %v669, %v690
        %v692 = vlaneseq
        %v693 = vshrl.u32 %v692, 7
        %v694 = vsub.s32 0, %v693
        %v695 = vrot.slane %v670, %v694
        %v696 = vlaneseq
        %v697 = vshrl.u32 %v696, 7
        %v698 = vsub.s32 0, %v697
        %v699 = vrot.slane %v671, %v698
        %v700 = vlaneseq
        %v701 = vshrl.u32 %v700, 7
        %v702 = vsub.s32 0, %v701
        %v703 = vrot.slane %v672, %v702
        %v704 = vlaneseq
        %v705 = vshrl.u32 %v704, 7
        %v706 = vsub.s32 0, %v705
        %v707 = vrot.slane %v673, %v706
        %v708 = vlaneseq
        %v709 = vshrl.u32 %v708, 7
        %v710 = vsub.s32 0, %v709
        %v711 = vrot.slane %v674, %v710
        %v712 = vlaneseq
        %v713 = vshrl.u32 %v712, 7
        %v714 = vsub.s32 0, %v713
        %v715 = vrot.slane %v675, %v714
        %v716 = vlaneseq
        %v717 = vshrl.u32 %v716, 7
        %v718 = vsub.s32 0, %v717
        %v719 = vrot.slane %v676, %v718
        %v720 = vlaneseq
        %v721 = vshrl.u32 %v720, 7
        %v722 = vsub.s32 0, %v721
        %v723 = vrot.slane %v677, %v722
        %v724 = vlaneseq
        %v725 = vshrl.u32 %v724, 7
        %v726 = vsub.s32 0, %v725
        %v727 = vrot.slane %v678, %v726
        %v728 = vlaneseq
        %v729 = vshrl.u32 %v728, 7
        %v730 = vsub.s32 0, %v729
        %v731 = vrot.slane %v679, %v730
        %v732 = vlaneseq
        %v733 = vshrl.u32 %v732, 7
        %v734 = vsub.s32 0, %v733
        %v735 = vrot.slane %v680, %v734
        %v736 = vlaneseq
        %v737 = vshrl.u32 %v736, 7
        %v738 = vsub.s32 0, %v737
        %v739 = vrot.slane %v681, %v738
        %v740 = vlaneseq
        %v741 = vshrl.u32 %v740, 7
        %v742 = vsub.s32 0, %v741
        %v743 = vrot.slane %v682, %v742
        %v744 = vlaneseq
        %v745 = vshrl.u32 %v744, 7
        %v746 = vsub.s32 0, %v745
        %v747 = vrot.slane %v683, %v746
        %vm748 = vcmp.eq.s32.totalorder %v687, 1
        %vm749 = vcmp.eq.s32.totalorder %v691, 1
        %vm750 = vcmp.eq.s32.totalorder %v695, 1
        %vm751 = vcmp.eq.s32.totalorder %v699, 1
        %vm752 = vcmp.eq.s32.totalorder %v703, 1
        %vm753 = vcmp.eq.s32.totalorder %v707, 1
        %vm754 = vcmp.eq.s32.totalorder %v711, 1
        %vm755 = vcmp.eq.s32.totalorder %v715, 1
        %vm756 = vcmp.eq.s32.totalorder %v719, 1
        %vm757 = vcmp.eq.s32.totalorder %v723, 1
        %vm758 = vcmp.eq.s32.totalorder %v727, 1
        %vm759 = vcmp.eq.s32.totalorder %v731, 1
        %vm760 = vcmp.eq.s32.totalorder %v735, 1
        %vm761 = vcmp.eq.s32.totalorder %v739, 1
        %vm762 = vcmp.eq.s32.totalorder %v743, 1
        %vm763 = vcmp.eq.s32.totalorder %v747, 1
        %v764 = vsel %vm748, %v216, -inf
        %v765 = vsel %vm748, %v217, -inf
        %v766 = vsel %vm749, %v218, -inf
        %v767 = vsel %vm749, %v219, -inf
        %v768 = vsel %vm750, %v220, -inf
        %v769 = vsel %vm750, %v221, -inf
        %v770 = vsel %vm751, %v222, -inf
        %v771 = vsel %vm751, %v223, -inf
        %v772 = vsel %vm752, %v224, -inf
        %v773 = vsel %vm752, %v225, -inf
        %v774 = vsel %vm753, %v226, -inf
        %v775 = vsel %vm753, %v227, -inf
        %v776 = vsel %vm754, %v228, -inf
        %v777 = vsel %vm754, %v229, -inf
        %v778 = vsel %vm755, %v230, -inf
        %v779 = vsel %vm755, %v231, -inf
        %v780 = vsel %vm756, %v232, -inf
        %v781 = vsel %vm756, %v233, -inf
        %v782 = vsel %vm757, %v234, -inf
        %v783 = vsel %vm757, %v235, -inf
        %v784 = vsel %vm758, %v236, -inf
        %v785 = vsel %vm758, %v237, -inf
        %v786 = vsel %vm759, %v238, -inf
        %v787 = vsel %vm759, %v239, -inf
        %v788 = vsel %vm760, %v240, -inf
        %v789 = vsel %vm760, %v241, -inf
        %v790 = vsel %vm761, %v242, -inf
        %v791 = vsel %vm761, %v243, -inf
        %v792 = vsel %vm762, %v244, -inf
        %v793 = vsel %vm762, %v245, -inf
        %v794 = vsel %vm763, %v246, -inf
        %v795 = vsel %vm763, %v247, -inf
        %v796 = vmax.f32 %v764, %v768
        %v797 = vmax.f32 %v766, %v770
        %v798 = vmax.f32 %v796, %v772
        %v799 = vmax.f32 %v797, %v774
        %v800 = vmax.f32 %v798, %v776
        %v801 = vmax.f32 %v799, %v778
        %v802 = vmax.f32 %v800, %v780
        %v803 = vmax.f32 %v801, %v782
        %v804 = vmax.f32 %v802, %v784
        %v805 = vmax.f32 %v803, %v786
        %v806 = vmax.f32 %v804, %v788
        %v807 = vmax.f32 %v805, %v790
        %v808 = vmax.f32 %v806, %v792
        %v809 = vmax.f32 %v807, %v794
        %v810 = vmax.f32 %v808, %v809
        %v811 = vmax.f32 %v765, %v769
        %v812 = vmax.f32 %v767, %v771
        %v813 = vmax.f32 %v811, %v773
        %v814 = vmax.f32 %v812, %v775
        %v815 = vmax.f32 %v813, %v777
        %v816 = vmax.f32 %v814, %v779
        %v817 = vmax.f32 %v815, %v781
        %v818 = vmax.f32 %v816, %v783
        %v819 = vmax.f32 %v817, %v785
        %v820 = vmax.f32 %v818, %v787
        %v821 = vmax.f32 %v819, %v789
        %v822 = vmax.f32 %v820, %v791
        %v823 = vmax.f32 %v821, %v793
        %v824 = vmax.f32 %v822, %v795
        %v825 = vmax.f32 %v823, %v824
        %s826 = sld [smem:[#allocation6 + %s267]]
        %s827 = sld [smem:[#allocation7 + %s267]]
        %v828 = vstv %s826
        %vm829 = vcmp.ge.s32.totalorder %v265, %v828
        %vm830 = vcmp.ge.s32.totalorder %v266, %v828
        %v831 = vstv %s827
        %vm832 = vcmp.lt.s32.totalorder %v265, %v831
        %vm833 = vcmp.lt.s32.totalorder %v266, %v831
        %vm834 = vmand %vm829, %vm832
        %vm835 = vmand %vm830, %vm833
        %v836 = vsel %vm834, 1, 0
        %v837 = vsel %vm835, 1, 0
        %vm838 = vcmp.eq.s32.totalorder %v836, 1
        %vm839 = vcmp.eq.s32.totalorder %v837, 1
        %v840 = vsel %vm838, %v810, -inf
        %v841 = vsel %vm839, %v825, -inf
        %v842 = vmax.f32 %v840, %v841
        %v843 = vrot.slane %v842, 4
        %v844 = vmax.f32 %v842, %v843
        %v845 = vrot.slane %v844, 2
        %v846 = vmax.f32 %v844, %v845
        %v847 = vrot.slane %v846, 1
        %v848 = vmax.f32 %v846, %v847
        %p849 = scmp.le.s32.totalorder %s827, %s826
        %p850 = por %p617, %p849
        %s851 = scalar_select %p850, 1, 0
        %v852 = vstv %s851
        %vm853 = vcmp.eq.s32.totalorder %v852, 1
        %v854 = vsel %vm853, 0.0, %v848
        %v855 = vsel %vm510, %v854, 0.0
        %s856 = sld [smem:[#allocation6 + %s512]]
        %s857 = sld [smem:[#allocation7 + %s512]]
        %v858 = vstv %s856
        %vm859 = vcmp.ge.s32.totalorder %v265, %v858
        %vm860 = vcmp.ge.s32.totalorder %v266, %v858
        %v861 = vstv %s857
        %vm862 = vcmp.lt.s32.totalorder %v265, %v861
        %vm863 = vcmp.lt.s32.totalorder %v266, %v861
        %vm864 = vmand %vm859, %vm862
        %vm865 = vmand %vm860, %vm863
        %v866 = vsel %vm864, 1, 0
        %v867 = vsel %vm865, 1, 0
        %vm868 = vcmp.eq.s32.totalorder %v866, 1
        %vm869 = vcmp.eq.s32.totalorder %v867, 1
        %v870 = vsel %vm868, %v810, -inf
        %v871 = vsel %vm869, %v825, -inf
        %v872 = vmax.f32 %v870, %v871
        %v873 = vrot.slane %v872, 4
        %v874 = vmax.f32 %v872, %v873
        %v875 = vrot.slane %v874, 2
        %v876 = vmax.f32 %v874, %v875
        %v877 = vrot.slane %v876, 1
        %v878 = vmax.f32 %v876, %v877
        %p879 = scmp.le.s32.totalorder %s857, %s856
        %p880 = por %p617, %p879
        %s881 = scalar_select %p880, 1, 0
        %v882 = vstv %s881
        %vm883 = vcmp.eq.s32.totalorder %v882, 1
        %v884 = vsel %vm883, 0.0, %v878
        %v885 = vsel %vm544, %v884, %v855
        %s886 = sld [smem:[#allocation6 + %s546]]
        %s887 = sld [smem:[#allocation7 + %s546]]
        %v888 = vstv %s886
        %vm889 = vcmp.ge.s32.totalorder %v265, %v888
        %vm890 = vcmp.ge.s32.totalorder %v266, %v888
        %v891 = vstv %s887
        %vm892 = vcmp.lt.s32.totalorder %v265, %v891
        %vm893 = vcmp.lt.s32.totalorder %v266, %v891
        %vm894 = vmand %vm889, %vm892
        %vm895 = vmand %vm890, %vm893
        %v896 = vsel %vm894, 1, 0
        %v897 = vsel %vm895, 1, 0
        %vm898 = vcmp.eq.s32.totalorder %v896, 1
        %vm899 = vcmp.eq.s32.totalorder %v897, 1
        %v900 = vsel %vm898, %v810, -inf
        %v901 = vsel %vm899, %v825, -inf
        %v902 = vmax.f32 %v900, %v901
        %v903 = vrot.slane %v902, 4
        %v904 = vmax.f32 %v902, %v903
        %v905 = vrot.slane %v904, 2
        %v906 = vmax.f32 %v904, %v905
        %v907 = vrot.slane %v906, 1
        %v908 = vmax.f32 %v906, %v907
        %p909 = scmp.le.s32.totalorder %s887, %s886
        %p910 = por %p617, %p909
        %s911 = scalar_select %p910, 1, 0
        %v912 = vstv %s911
        %vm913 = vcmp.eq.s32.totalorder %v912, 1
        %v914 = vsel %vm913, 0.0, %v908
        %v915 = vsel %vm578, %v914, %v885
        %s916 = sld [smem:[#allocation6 + %s580]]
        %s917 = sld [smem:[#allocation7 + %s580]]
        %v918 = vstv %s916
        %vm919 = vcmp.ge.s32.totalorder %v265, %v918
        %vm920 = vcmp.ge.s32.totalorder %v266, %v918
        %v921 = vstv %s917
        %vm922 = vcmp.lt.s32.totalorder %v265, %v921
        %vm923 = vcmp.lt.s32.totalorder %v266, %v921
        %vm924 = vmand %vm919, %vm922
        %vm925 = vmand %vm920, %vm923
        %v926 = vsel %vm924, 1, 0
        %v927 = vsel %vm925, 1, 0
        %vm928 = vcmp.eq.s32.totalorder %v926, 1
        %vm929 = vcmp.eq.s32.totalorder %v927, 1
        %v930 = vsel %vm928, %v810, -inf
        %v931 = vsel %vm929, %v825, -inf
        %v932 = vmax.f32 %v930, %v931
        %v933 = vrot.slane %v932, 4
        %v934 = vmax.f32 %v932, %v933
        %v935 = vrot.slane %v934, 2
        %v936 = vmax.f32 %v934, %v935
        %v937 = vrot.slane %v936, 1
        %v938 = vmax.f32 %v936, %v937
        %p939 = scmp.le.s32.totalorder %s917, %s916
        %p940 = por %p617, %p939
        %s941 = scalar_select %p940, 1, 0
        %v942 = vstv %s941
        %vm943 = vcmp.eq.s32.totalorder %v942, 1
        %v944 = vsel %vm943, 0.0, %v938
        %v945 = vsel %vm612, %v944, %v915
        %946 = vst [vmem:[%s213 + $0x4] sm:$0xf] %v945
        %s947 = sld [smem:[#allocation4 + %s546]]
        %s948 = sld [smem:[#allocation5 + %s546]]
        %p949 = scmp.le.s32.totalorder %s948, %s947
        %v950 = vstv %s947
        %vm951 = vcmp.ge.s32.totalorder %v248, %v950
        %vm952 = vcmp.ge.s32.totalorder %v249, %v950
        %vm953 = vcmp.ge.s32.totalorder %v250, %v950
        %vm954 = vcmp.ge.s32.totalorder %v251, %v950
        %vm955 = vcmp.ge.s32.totalorder %v252, %v950
        %vm956 = vcmp.ge.s32.totalorder %v253, %v950
        %vm957 = vcmp.ge.s32.totalorder %v254, %v950
        %vm958 = vcmp.ge.s32.totalorder %v255, %v950
        %vm959 = vcmp.ge.s32.totalorder %v256, %v950
        %vm960 = vcmp.ge.s32.totalorder %v257, %v950
        %vm961 = vcmp.ge.s32.totalorder %v258, %v950
        %vm962 = vcmp.ge.s32.totalorder %v259, %v950
        %vm963 = vcmp.ge.s32.totalorder %v260, %v950
        %vm964 = vcmp.ge.s32.totalorder %v261, %v950
        %vm965 = vcmp.ge.s32.totalorder %v262, %v950
        %vm966 = vcmp.ge.s32.totalorder %v263, %v950
        %v967 = vstv %s948
        %vm968 = vcmp.lt.s32.totalorder %v248, %v967
        %vm969 = vcmp.lt.s32.totalorder %v249, %v967
        %vm970 = vcmp.lt.s32.totalorder %v250, %v967
        %vm971 = vcmp.lt.s32.totalorder %v251, %v967
        %vm972 = vcmp.lt.s32.totalorder %v252, %v967
        %vm973 = vcmp.lt.s32.totalorder %v253, %v967
        %vm974 = vcmp.lt.s32.totalorder %v254, %v967
        %vm975 = vcmp.lt.s32.totalorder %v255, %v967
        %vm976 = vcmp.lt.s32.totalorder %v256, %v967
        %vm977 = vcmp.lt.s32.totalorder %v257, %v967
        %vm978 = vcmp.lt.s32.totalorder %v258, %v967
        %vm979 = vcmp.lt.s32.totalorder %v259, %v967
        %vm980 = vcmp.lt.s32.totalorder %v260, %v967
        %vm981 = vcmp.lt.s32.totalorder %v261, %v967
        %vm982 = vcmp.lt.s32.totalorder %v262, %v967
        %vm983 = vcmp.lt.s32.totalorder %v263, %v967
        %vm984 = vmand %vm951, %vm968
        %vm985 = vmand %vm952, %vm969
        %vm986 = vmand %vm953, %vm970
        %vm987 = vmand %vm954, %vm971
        %vm988 = vmand %vm955, %vm972
        %vm989 = vmand %vm956, %vm973
        %vm990 = vmand %vm957, %vm974
        %vm991 = vmand %vm958, %vm975
        %vm992 = vmand %vm959, %vm976
        %vm993 = vmand %vm960, %vm977
        %vm994 = vmand %vm961, %vm978
        %vm995 = vmand %vm962, %vm979
        %vm996 = vmand %vm963, %vm980
        %vm997 = vmand %vm964, %vm981
        %vm998 = vmand %vm965, %vm982
        %vm999 = vmand %vm966, %vm983
        %v1000 = vsel %vm984, 1, 0
        %v1001 = vsel %vm985, 1, 0
        %v1002 = vsel %vm986, 1, 0
        %v1003 = vsel %vm987, 1, 0
        %v1004 = vsel %vm988, 1, 0
        %v1005 = vsel %vm989, 1, 0
        %v1006 = vsel %vm990, 1, 0
        %v1007 = vsel %vm991, 1, 0
        %v1008 = vsel %vm992, 1, 0
        %v1009 = vsel %vm993, 1, 0
        %v1010 = vsel %vm994, 1, 0
        %v1011 = vsel %vm995, 1, 0
        %v1012 = vsel %vm996, 1, 0
        %v1013 = vsel %vm997, 1, 0
        %v1014 = vsel %vm998, 1, 0
        %v1015 = vsel %vm999, 1, 0
        %v1016 = vlaneseq
        %v1017 = vshrl.u32 %v1016, 7
        %v1018 = vsub.s32 0, %v1017
        %v1019 = vrot.slane %v1000, %v1018
        %v1020 = vlaneseq
        %v1021 = vshrl.u32 %v1020, 7
        %v1022 = vsub.s32 0, %v1021
        %v1023 = vrot.slane %v1001, %v1022
        %v1024 = vlaneseq
        %v1025 = vshrl.u32 %v1024, 7
        %v1026 = vsub.s32 0, %v1025
        %v1027 = vrot.slane %v1002, %v1026
        %v1028 = vlaneseq
        %v1029 = vshrl.u32 %v1028, 7
        %v1030 = vsub.s32 0, %v1029
        %v1031 = vrot.slane %v1003, %v1030
        %v1032 = vlaneseq
        %v1033 = vshrl.u32 %v1032, 7
        %v1034 = vsub.s32 0, %v1033
        %v1035 = vrot.slane %v1004, %v1034
        %v1036 = vlaneseq
        %v1037 = vshrl.u32 %v1036, 7
        %v1038 = vsub.s32 0, %v1037
        %v1039 = vrot.slane %v1005, %v1038
        %v1040 = vlaneseq
        %v1041 = vshrl.u32 %v1040, 7
        %v1042 = vsub.s32 0, %v1041
        %v1043 = vrot.slane %v1006, %v1042
        %v1044 = vlaneseq
        %v1045 = vshrl.u32 %v1044, 7
        %v1046 = vsub.s32 0, %v1045
        %v1047 = vrot.slane %v1007, %v1046
        %v1048 = vlaneseq
        %v1049 = vshrl.u32 %v1048, 7
        %v1050 = vsub.s32 0, %v1049
        %v1051 = vrot.slane %v1008, %v1050
        %v1052 = vlaneseq
        %v1053 = vshrl.u32 %v1052, 7
        %v1054 = vsub.s32 0, %v1053
        %v1055 = vrot.slane %v1009, %v1054
        %v1056 = vlaneseq
        %v1057 = vshrl.u32 %v1056, 7
        %v1058 = vsub.s32 0, %v1057
        %v1059 = vrot.slane %v1010, %v1058
        %v1060 = vlaneseq
        %v1061 = vshrl.u32 %v1060, 7
        %v1062 = vsub.s32 0, %v1061
        %v1063 = vrot.slane %v1011, %v1062
        %v1064 = vlaneseq
        %v1065 = vshrl.u32 %v1064, 7
        %v1066 = vsub.s32 0, %v1065
        %v1067 = vrot.slane %v1012, %v1066
        %v1068 = vlaneseq
        %v1069 = vshrl.u32 %v1068, 7
        %v1070 = vsub.s32 0, %v1069
        %v1071 = vrot.slane %v1013, %v1070
        %v1072 = vlaneseq
        %v1073 = vshrl.u32 %v1072, 7
        %v1074 = vsub.s32 0, %v1073
        %v1075 = vrot.slane %v1014, %v1074
        %v1076 = vlaneseq
        %v1077 = vshrl.u32 %v1076, 7
        %v1078 = vsub.s32 0, %v1077
        %v1079 = vrot.slane %v1015, %v1078
        %vm1080 = vcmp.eq.s32.totalorder %v1019, 1
        %vm1081 = vcmp.eq.s32.totalorder %v1023, 1
        %vm1082 = vcmp.eq.s32.totalorder %v1027, 1
        %vm1083 = vcmp.eq.s32.totalorder %v1031, 1
        %vm1084 = vcmp.eq.s32.totalorder %v1035, 1
        %vm1085 = vcmp.eq.s32.totalorder %v1039, 1
        %vm1086 = vcmp.eq.s32.totalorder %v1043, 1
        %vm1087 = vcmp.eq.s32.totalorder %v1047, 1
        %vm1088 = vcmp.eq.s32.totalorder %v1051, 1
        %vm1089 = vcmp.eq.s32.totalorder %v1055, 1
        %vm1090 = vcmp.eq.s32.totalorder %v1059, 1
        %vm1091 = vcmp.eq.s32.totalorder %v1063, 1
        %vm1092 = vcmp.eq.s32.totalorder %v1067, 1
        %vm1093 = vcmp.eq.s32.totalorder %v1071, 1
        %vm1094 = vcmp.eq.s32.totalorder %v1075, 1
        %vm1095 = vcmp.eq.s32.totalorder %v1079, 1
        %v1096 = vsel %vm1080, %v216, -inf
        %v1097 = vsel %vm1080, %v217, -inf
        %v1098 = vsel %vm1081, %v218, -inf
        %v1099 = vsel %vm1081, %v219, -inf
        %v1100 = vsel %vm1082, %v220, -inf
        %v1101 = vsel %vm1082, %v221, -inf
        %v1102 = vsel %vm1083, %v222, -inf
        %v1103 = vsel %vm1083, %v223, -inf
        %v1104 = vsel %vm1084, %v224, -inf
        %v1105 = vsel %vm1084, %v225, -inf
        %v1106 = vsel %vm1085, %v226, -inf
        %v1107 = vsel %vm1085, %v227, -inf
        %v1108 = vsel %vm1086, %v228, -inf
        %v1109 = vsel %vm1086, %v229, -inf
        %v1110 = vsel %vm1087, %v230, -inf
        %v1111 = vsel %vm1087, %v231, -inf
        %v1112 = vsel %vm1088, %v232, -inf
        %v1113 = vsel %vm1088, %v233, -inf
        %v1114 = vsel %vm1089, %v234, -inf
        %v1115 = vsel %vm1089, %v235, -inf
        %v1116 = vsel %vm1090, %v236, -inf
        %v1117 = vsel %vm1090, %v237, -inf
        %v1118 = vsel %vm1091, %v238, -inf
        %v1119 = vsel %vm1091, %v239, -inf
        %v1120 = vsel %vm1092, %v240, -inf
        %v1121 = vsel %vm1092, %v241, -inf
        %v1122 = vsel %vm1093, %v242, -inf
        %v1123 = vsel %vm1093, %v243, -inf
        %v1124 = vsel %vm1094, %v244, -inf
        %v1125 = vsel %vm1094, %v245, -inf
        %v1126 = vsel %vm1095, %v246, -inf
        %v1127 = vsel %vm1095, %v247, -inf
        %v1128 = vmax.f32 %v1096, %v1100
        %v1129 = vmax.f32 %v1098, %v1102
        %v1130 = vmax.f32 %v1128, %v1104
        %v1131 = vmax.f32 %v1129, %v1106
        %v1132 = vmax.f32 %v1130, %v1108
        %v1133 = vmax.f32 %v1131, %v1110
        %v1134 = vmax.f32 %v1132, %v1112
        %v1135 = vmax.f32 %v1133, %v1114
        %v1136 = vmax.f32 %v1134, %v1116
        %v1137 = vmax.f32 %v1135, %v1118
        %v1138 = vmax.f32 %v1136, %v1120
        %v1139 = vmax.f32 %v1137, %v1122
        %v1140 = vmax.f32 %v1138, %v1124
        %v1141 = vmax.f32 %v1139, %v1126
        %v1142 = vmax.f32 %v1140, %v1141
        %v1143 = vmax.f32 %v1097, %v1101
        %v1144 = vmax.f32 %v1099, %v1103
        %v1145 = vmax.f32 %v1143, %v1105
        %v1146 = vmax.f32 %v1144, %v1107
        %v1147 = vmax.f32 %v1145, %v1109
        %v1148 = vmax.f32 %v1146, %v1111
        %v1149 = vmax.f32 %v1147, %v1113
        %v1150 = vmax.f32 %v1148, %v1115
        %v1151 = vmax.f32 %v1149, %v1117
        %v1152 = vmax.f32 %v1150, %v1119
        %v1153 = vmax.f32 %v1151, %v1121
        %v1154 = vmax.f32 %v1152, %v1123
        %v1155 = vmax.f32 %v1153, %v1125
        %v1156 = vmax.f32 %v1154, %v1127
        %v1157 = vmax.f32 %v1155, %v1156
        %s1158 = sld [smem:[#allocation6 + %s267]]
        %s1159 = sld [smem:[#allocation7 + %s267]]
        %v1160 = vstv %s1158
        %vm1161 = vcmp.ge.s32.totalorder %v265, %v1160
        %vm1162 = vcmp.ge.s32.totalorder %v266, %v1160
        %v1163 = vstv %s1159
        %vm1164 = vcmp.lt.s32.totalorder %v265, %v1163
        %vm1165 = vcmp.lt.s32.totalorder %v266, %v1163
        %vm1166 = vmand %vm1161, %vm1164
        %vm1167 = vmand %vm1162, %vm1165
        %v1168 = vsel %vm1166, 1, 0
        %v1169 = vsel %vm1167, 1, 0
        %vm1170 = vcmp.eq.s32.totalorder %v1168, 1
        %vm1171 = vcmp.eq.s32.totalorder %v1169, 1
        %v1172 = vsel %vm1170, %v1142, -inf
        %v1173 = vsel %vm1171, %v1157, -inf
        %v1174 = vmax.f32 %v1172, %v1173
        %v1175 = vrot.slane %v1174, 4
        %v1176 = vmax.f32 %v1174, %v1175
        %v1177 = vrot.slane %v1176, 2
        %v1178 = vmax.f32 %v1176, %v1177
        %v1179 = vrot.slane %v1178, 1
        %v1180 = vmax.f32 %v1178, %v1179
        %p1181 = scmp.le.s32.totalorder %s1159, %s1158
        %p1182 = por %p949, %p1181
        %s1183 = scalar_select %p1182, 1, 0
        %v1184 = vstv %s1183
        %vm1185 = vcmp.eq.s32.totalorder %v1184, 1
        %v1186 = vsel %vm1185, 0.0, %v1180
        %v1187 = vsel %vm510, %v1186, 0.0
        %s1188 = sld [smem:[#allocation6 + %s512]]
        %s1189 = sld [smem:[#allocation7 + %s512]]
        %v1190 = vstv %s1188
        %vm1191 = vcmp.ge.s32.totalorder %v265, %v1190
        %vm1192 = vcmp.ge.s32.totalorder %v266, %v1190
        %v1193 = vstv %s1189
        %vm1194 = vcmp.lt.s32.totalorder %v265, %v1193
        %vm1195 = vcmp.lt.s32.totalorder %v266, %v1193
        %vm1196 = vmand %vm1191, %vm1194
        %vm1197 = vmand %vm1192, %vm1195
        %v1198 = vsel %vm1196, 1, 0
        %v1199 = vsel %vm1197, 1, 0
        %vm1200 = vcmp.eq.s32.totalorder %v1198, 1
        %vm1201 = vcmp.eq.s32.totalorder %v1199, 1
        %v1202 = vsel %vm1200, %v1142, -inf
        %v1203 = vsel %vm1201, %v1157, -inf
        %v1204 = vmax.f32 %v1202, %v1203
        %v1205 = vrot.slane %v1204, 4
        %v1206 = vmax.f32 %v1204, %v1205
        %v1207 = vrot.slane %v1206, 2
        %v1208 = vmax.f32 %v1206, %v1207
        %v1209 = vrot.slane %v1208, 1
        %v1210 = vmax.f32 %v1208, %v1209
        %p1211 = scmp.le.s32.totalorder %s1189, %s1188
        %p1212 = por %p949, %p1211
        %s1213 = scalar_select %p1212, 1, 0
        %v1214 = vstv %s1213
        %vm1215 = vcmp.eq.s32.totalorder %v1214, 1
        %v1216 = vsel %vm1215, 0.0, %v1210
        %v1217 = vsel %vm544, %v1216, %v1187
        %s1218 = sld [smem:[#allocation6 + %s546]]
        %s1219 = sld [smem:[#allocation7 + %s546]]
        %v1220 = vstv %s1218
        %vm1221 = vcmp.ge.s32.totalorder %v265, %v1220
        %vm1222 = vcmp.ge.s32.totalorder %v266, %v1220
        %v1223 = vstv %s1219
        %vm1224 = vcmp.lt.s32.totalorder %v265, %v1223
        %vm1225 = vcmp.lt.s32.totalorder %v266, %v1223
        %vm1226 = vmand %vm1221, %vm1224
        %vm1227 = vmand %vm1222, %vm1225
        %v1228 = vsel %vm1226, 1, 0
        %v1229 = vsel %vm1227, 1, 0
        %vm1230 = vcmp.eq.s32.totalorder %v1228, 1
        %vm1231 = vcmp.eq.s32.totalorder %v1229, 1
        %v1232 = vsel %vm1230, %v1142, -inf
        %v1233 = vsel %vm1231, %v1157, -inf
        %v1234 = vmax.f32 %v1232, %v1233
        %v1235 = vrot.slane %v1234, 4
        %v1236 = vmax.f32 %v1234, %v1235
        %v1237 = vrot.slane %v1236, 2
        %v1238 = vmax.f32 %v1236, %v1237
        %v1239 = vrot.slane %v1238, 1
        %v1240 = vmax.f32 %v1238, %v1239
        %p1241 = scmp.le.s32.totalorder %s1219, %s1218
        %p1242 = por %p949, %p1241
        %s1243 = scalar_select %p1242, 1, 0
        %v1244 = vstv %s1243
        %vm1245 = vcmp.eq.s32.totalorder %v1244, 1
        %v1246 = vsel %vm1245, 0.0, %v1240
        %v1247 = vsel %vm578, %v1246, %v1217
        %s1248 = sld [smem:[#allocation6 + %s580]]
        %s1249 = sld [smem:[#allocation7 + %s580]]
        %v1250 = vstv %s1248
        %vm1251 = vcmp.ge.s32.totalorder %v265, %v1250
        %vm1252 = vcmp.ge.s32.totalorder %v266, %v1250
        %v1253 = vstv %s1249
        %vm1254 = vcmp.lt.s32.totalorder %v265, %v1253
        %vm1255 = vcmp.lt.s32.totalorder %v266, %v1253
        %vm1256 = vmand %vm1251, %vm1254
        %vm1257 = vmand %vm1252, %vm1255
        %v1258 = vsel %vm1256, 1, 0
        %v1259 = vsel %vm1257, 1, 0
        %vm1260 = vcmp.eq.s32.totalorder %v1258, 1
        %vm1261 = vcmp.eq.s32.totalorder %v1259, 1
        %v1262 = vsel %vm1260, %v1142, -inf
        %v1263 = vsel %vm1261, %v1157, -inf
        %v1264 = vmax.f32 %v1262, %v1263
        %v1265 = vrot.slane %v1264, 4
        %v1266 = vmax.f32 %v1264, %v1265
        %v1267 = vrot.slane %v1266, 2
        %v1268 = vmax.f32 %v1266, %v1267
        %v1269 = vrot.slane %v1268, 1
        %v1270 = vmax.f32 %v1268, %v1269
        %p1271 = scmp.le.s32.totalorder %s1249, %s1248
        %p1272 = por %p949, %p1271
        %s1273 = scalar_select %p1272, 1, 0
        %v1274 = vstv %s1273
        %vm1275 = vcmp.eq.s32.totalorder %v1274, 1
        %v1276 = vsel %vm1275, 0.0, %v1270
        %v1277 = vsel %vm612, %v1276, %v1247
        %1278 = vst [vmem:[%s213 + $0x8] sm:$0xf] %v1277
        %s1279 = sld [smem:[#allocation4 + %s580]]
        %s1280 = sld [smem:[#allocation5 + %s580]]
        %p1281 = scmp.le.s32.totalorder %s1280, %s1279
        %v1282 = vstv %s1279
        %vm1283 = vcmp.ge.s32.totalorder %v248, %v1282
        %vm1284 = vcmp.ge.s32.totalorder %v249, %v1282
        %vm1285 = vcmp.ge.s32.totalorder %v250, %v1282
        %vm1286 = vcmp.ge.s32.totalorder %v251, %v1282
        %vm1287 = vcmp.ge.s32.totalorder %v252, %v1282
        %vm1288 = vcmp.ge.s32.totalorder %v253, %v1282
        %vm1289 = vcmp.ge.s32.totalorder %v254, %v1282
        %vm1290 = vcmp.ge.s32.totalorder %v255, %v1282
        %vm1291 = vcmp.ge.s32.totalorder %v256, %v1282
        %vm1292 = vcmp.ge.s32.totalorder %v257, %v1282
        %vm1293 = vcmp.ge.s32.totalorder %v258, %v1282
        %vm1294 = vcmp.ge.s32.totalorder %v259, %v1282
        %vm1295 = vcmp.ge.s32.totalorder %v260, %v1282
        %vm1296 = vcmp.ge.s32.totalorder %v261, %v1282
        %vm1297 = vcmp.ge.s32.totalorder %v262, %v1282
        %vm1298 = vcmp.ge.s32.totalorder %v263, %v1282
        %v1299 = vstv %s1280
        %vm1300 = vcmp.lt.s32.totalorder %v248, %v1299
        %vm1301 = vcmp.lt.s32.totalorder %v249, %v1299
        %vm1302 = vcmp.lt.s32.totalorder %v250, %v1299
        %vm1303 = vcmp.lt.s32.totalorder %v251, %v1299
        %vm1304 = vcmp.lt.s32.totalorder %v252, %v1299
        %vm1305 = vcmp.lt.s32.totalorder %v253, %v1299
        %vm1306 = vcmp.lt.s32.totalorder %v254, %v1299
        %vm1307 = vcmp.lt.s32.totalorder %v255, %v1299
        %vm1308 = vcmp.lt.s32.totalorder %v256, %v1299
        %vm1309 = vcmp.lt.s32.totalorder %v257, %v1299
        %vm1310 = vcmp.lt.s32.totalorder %v258, %v1299
        %vm1311 = vcmp.lt.s32.totalorder %v259, %v1299
        %vm1312 = vcmp.lt.s32.totalorder %v260, %v1299
        %vm1313 = vcmp.lt.s32.totalorder %v261, %v1299
        %vm1314 = vcmp.lt.s32.totalorder %v262, %v1299
        %vm1315 = vcmp.lt.s32.totalorder %v263, %v1299
        %vm1316 = vmand %vm1283, %vm1300
        %vm1317 = vmand %vm1284, %vm1301
        %vm1318 = vmand %vm1285, %vm1302
        %vm1319 = vmand %vm1286, %vm1303
        %vm1320 = vmand %vm1287, %vm1304
        %vm1321 = vmand %vm1288, %vm1305
        %vm1322 = vmand %vm1289, %vm1306
        %vm1323 = vmand %vm1290, %vm1307
        %vm1324 = vmand %vm1291, %vm1308
        %vm1325 = vmand %vm1292, %vm1309
        %vm1326 = vmand %vm1293, %vm1310
        %vm1327 = vmand %vm1294, %vm1311
        %vm1328 = vmand %vm1295, %vm1312
        %vm1329 = vmand %vm1296, %vm1313
        %vm1330 = vmand %vm1297, %vm1314
        %vm1331 = vmand %vm1298, %vm1315
        %v1332 = vsel %vm1316, 1, 0
        %v1333 = vsel %vm1317, 1, 0
        %v1334 = vsel %vm1318, 1, 0
        %v1335 = vsel %vm1319, 1, 0
        %v1336 = vsel %vm1320, 1, 0
        %v1337 = vsel %vm1321, 1, 0
        %v1338 = vsel %vm1322, 1, 0
        %v1339 = vsel %vm1323, 1, 0
        %v1340 = vsel %vm1324, 1, 0
        %v1341 = vsel %vm1325, 1, 0
        %v1342 = vsel %vm1326, 1, 0
        %v1343 = vsel %vm1327, 1, 0
        %v1344 = vsel %vm1328, 1, 0
        %v1345 = vsel %vm1329, 1, 0
        %v1346 = vsel %vm1330, 1, 0
        %v1347 = vsel %vm1331, 1, 0
        %v1348 = vlaneseq
        %v1349 = vshrl.u32 %v1348, 7
        %v1350 = vsub.s32 0, %v1349
        %v1351 = vrot.slane %v1332, %v1350
        %v1352 = vlaneseq
        %v1353 = vshrl.u32 %v1352, 7
        %v1354 = vsub.s32 0, %v1353
        %v1355 = vrot.slane %v1333, %v1354
        %v1356 = vlaneseq
        %v1357 = vshrl.u32 %v1356, 7
        %v1358 = vsub.s32 0, %v1357
        %v1359 = vrot.slane %v1334, %v1358
        %v1360 = vlaneseq
        %v1361 = vshrl.u32 %v1360, 7
        %v1362 = vsub.s32 0, %v1361
        %v1363 = vrot.slane %v1335, %v1362
        %v1364 = vlaneseq
        %v1365 = vshrl.u32 %v1364, 7
        %v1366 = vsub.s32 0, %v1365
        %v1367 = vrot.slane %v1336, %v1366
        %v1368 = vlaneseq
        %v1369 = vshrl.u32 %v1368, 7
        %v1370 = vsub.s32 0, %v1369
        %v1371 = vrot.slane %v1337, %v1370
        %v1372 = vlaneseq
        %v1373 = vshrl.u32 %v1372, 7
        %v1374 = vsub.s32 0, %v1373
        %v1375 = vrot.slane %v1338, %v1374
        %v1376 = vlaneseq
        %v1377 = vshrl.u32 %v1376, 7
        %v1378 = vsub.s32 0, %v1377
        %v1379 = vrot.slane %v1339, %v1378
        %v1380 = vlaneseq
        %v1381 = vshrl.u32 %v1380, 7
        %v1382 = vsub.s32 0, %v1381
        %v1383 = vrot.slane %v1340, %v1382
        %v1384 = vlaneseq
        %v1385 = vshrl.u32 %v1384, 7
        %v1386 = vsub.s32 0, %v1385
        %v1387 = vrot.slane %v1341, %v1386
        %v1388 = vlaneseq
        %v1389 = vshrl.u32 %v1388, 7
        %v1390 = vsub.s32 0, %v1389
        %v1391 = vrot.slane %v1342, %v1390
        %v1392 = vlaneseq
        %v1393 = vshrl.u32 %v1392, 7
        %v1394 = vsub.s32 0, %v1393
        %v1395 = vrot.slane %v1343, %v1394
        %v1396 = vlaneseq
        %v1397 = vshrl.u32 %v1396, 7
        %v1398 = vsub.s32 0, %v1397
        %v1399 = vrot.slane %v1344, %v1398
        %v1400 = vlaneseq
        %v1401 = vshrl.u32 %v1400, 7
        %v1402 = vsub.s32 0, %v1401
        %v1403 = vrot.slane %v1345, %v1402
        %v1404 = vlaneseq
        %v1405 = vshrl.u32 %v1404, 7
        %v1406 = vsub.s32 0, %v1405
        %v1407 = vrot.slane %v1346, %v1406
        %v1408 = vlaneseq
        %v1409 = vshrl.u32 %v1408, 7
        %v1410 = vsub.s32 0, %v1409
        %v1411 = vrot.slane %v1347, %v1410
        %vm1412 = vcmp.eq.s32.totalorder %v1351, 1
        %vm1413 = vcmp.eq.s32.totalorder %v1355, 1
        %vm1414 = vcmp.eq.s32.totalorder %v1359, 1
        %vm1415 = vcmp.eq.s32.totalorder %v1363, 1
        %vm1416 = vcmp.eq.s32.totalorder %v1367, 1
        %vm1417 = vcmp.eq.s32.totalorder %v1371, 1
        %vm1418 = vcmp.eq.s32.totalorder %v1375, 1
        %vm1419 = vcmp.eq.s32.totalorder %v1379, 1
        %vm1420 = vcmp.eq.s32.totalorder %v1383, 1
        %vm1421 = vcmp.eq.s32.totalorder %v1387, 1
        %vm1422 = vcmp.eq.s32.totalorder %v1391, 1
        %vm1423 = vcmp.eq.s32.totalorder %v1395, 1
        %vm1424 = vcmp.eq.s32.totalorder %v1399, 1
        %vm1425 = vcmp.eq.s32.totalorder %v1403, 1
        %vm1426 = vcmp.eq.s32.totalorder %v1407, 1
        %vm1427 = vcmp.eq.s32.totalorder %v1411, 1
        %v1428 = vsel %vm1412, %v216, -inf
        %v1429 = vsel %vm1412, %v217, -inf
        %v1430 = vsel %vm1413, %v218, -inf
        %v1431 = vsel %vm1413, %v219, -inf
        %v1432 = vsel %vm1414, %v220, -inf
        %v1433 = vsel %vm1414, %v221, -inf
        %v1434 = vsel %vm1415, %v222, -inf
        %v1435 = vsel %vm1415, %v223, -inf
        %v1436 = vsel %vm1416, %v224, -inf
        %v1437 = vsel %vm1416, %v225, -inf
        %v1438 = vsel %vm1417, %v226, -inf
        %v1439 = vsel %vm1417, %v227, -inf
        %v1440 = vsel %vm1418, %v228, -inf
        %v1441 = vsel %vm1418, %v229, -inf
        %v1442 = vsel %vm1419, %v230, -inf
        %v1443 = vsel %vm1419, %v231, -inf
        %v1444 = vsel %vm1420, %v232, -inf
        %v1445 = vsel %vm1420, %v233, -inf
        %v1446 = vsel %vm1421, %v234, -inf
        %v1447 = vsel %vm1421, %v235, -inf
        %v1448 = vsel %vm1422, %v236, -inf
        %v1449 = vsel %vm1422, %v237, -inf
        %v1450 = vsel %vm1423, %v238, -inf
        %v1451 = vsel %vm1423, %v239, -inf
        %v1452 = vsel %vm1424, %v240, -inf
        %v1453 = vsel %vm1424, %v241, -inf
        %v1454 = vsel %vm1425, %v242, -inf
        %v1455 = vsel %vm1425, %v243, -inf
        %v1456 = vsel %vm1426, %v244, -inf
        %v1457 = vsel %vm1426, %v245, -inf
        %v1458 = vsel %vm1427, %v246, -inf
        %v1459 = vsel %vm1427, %v247, -inf
        %v1460 = vmax.f32 %v1428, %v1432
        %v1461 = vmax.f32 %v1430, %v1434
        %v1462 = vmax.f32 %v1460, %v1436
        %v1463 = vmax.f32 %v1461, %v1438
        %v1464 = vmax.f32 %v1462, %v1440
        %v1465 = vmax.f32 %v1463, %v1442
        %v1466 = vmax.f32 %v1464, %v1444
        %v1467 = vmax.f32 %v1465, %v1446
        %v1468 = vmax.f32 %v1466, %v1448
        %v1469 = vmax.f32 %v1467, %v1450
        %v1470 = vmax.f32 %v1468, %v1452
        %v1471 = vmax.f32 %v1469, %v1454
        %v1472 = vmax.f32 %v1470, %v1456
        %v1473 = vmax.f32 %v1471, %v1458
        %v1474 = vmax.f32 %v1472, %v1473
        %v1475 = vmax.f32 %v1429, %v1433
        %v1476 = vmax.f32 %v1431, %v1435
        %v1477 = vmax.f32 %v1475, %v1437
        %v1478 = vmax.f32 %v1476, %v1439
        %v1479 = vmax.f32 %v1477, %v1441
        %v1480 = vmax.f32 %v1478, %v1443
        %v1481 = vmax.f32 %v1479, %v1445
        %v1482 = vmax.f32 %v1480, %v1447
        %v1483 = vmax.f32 %v1481, %v1449
        %v1484 = vmax.f32 %v1482, %v1451
        %v1485 = vmax.f32 %v1483, %v1453
        %v1486 = vmax.f32 %v1484, %v1455
        %v1487 = vmax.f32 %v1485, %v1457
        %v1488 = vmax.f32 %v1486, %v1459
        %v1489 = vmax.f32 %v1487, %v1488
        %s1490 = sld [smem:[#allocation6 + %s267]]
        %s1491 = sld [smem:[#allocation7 + %s267]]
        %v1492 = vstv %s1490
        %vm1493 = vcmp.ge.s32.totalorder %v265, %v1492
        %vm1494 = vcmp.ge.s32.totalorder %v266, %v1492
        %v1495 = vstv %s1491
        %vm1496 = vcmp.lt.s32.totalorder %v265, %v1495
        %vm1497 = vcmp.lt.s32.totalorder %v266, %v1495
        %vm1498 = vmand %vm1493, %vm1496
        %vm1499 = vmand %vm1494, %vm1497
        %v1500 = vsel %vm1498, 1, 0
        %v1501 = vsel %vm1499, 1, 0
        %vm1502 = vcmp.eq.s32.totalorder %v1500, 1
        %vm1503 = vcmp.eq.s32.totalorder %v1501, 1
        %v1504 = vsel %vm1502, %v1474, -inf
        %v1505 = vsel %vm1503, %v1489, -inf
        %v1506 = vmax.f32 %v1504, %v1505
        %v1507 = vrot.slane %v1506, 4
        %v1508 = vmax.f32 %v1506, %v1507
        %v1509 = vrot.slane %v1508, 2
        %v1510 = vmax.f32 %v1508, %v1509
        %v1511 = vrot.slane %v1510, 1
        %v1512 = vmax.f32 %v1510, %v1511
        %p1513 = scmp.le.s32.totalorder %s1491, %s1490
        %p1514 = por %p1281, %p1513
        %s1515 = scalar_select %p1514, 1, 0
        %v1516 = vstv %s1515
        %vm1517 = vcmp.eq.s32.totalorder %v1516, 1
        %v1518 = vsel %vm1517, 0.0, %v1512
        %v1519 = vsel %vm510, %v1518, 0.0
        %s1520 = sld [smem:[#allocation6 + %s512]]
        %s1521 = sld [smem:[#allocation7 + %s512]]
        %v1522 = vstv %s1520
        %vm1523 = vcmp.ge.s32.totalorder %v265, %v1522
        %vm1524 = vcmp.ge.s32.totalorder %v266, %v1522
        %v1525 = vstv %s1521
        %vm1526 = vcmp.lt.s32.totalorder %v265, %v1525
        %vm1527 = vcmp.lt.s32.totalorder %v266, %v1525
        %vm1528 = vmand %vm1523, %vm1526
        %vm1529 = vmand %vm1524, %vm1527
        %v1530 = vsel %vm1528, 1, 0
        %v1531 = vsel %vm1529, 1, 0
        %vm1532 = vcmp.eq.s32.totalorder %v1530, 1
        %vm1533 = vcmp.eq.s32.totalorder %v1531, 1
        %v1534 = vsel %vm1532, %v1474, -inf
        %v1535 = vsel %vm1533, %v1489, -inf
        %v1536 = vmax.f32 %v1534, %v1535
        %v1537 = vrot.slane %v1536, 4
        %v1538 = vmax.f32 %v1536, %v1537
        %v1539 = vrot.slane %v1538, 2
        %v1540 = vmax.f32 %v1538, %v1539
        %v1541 = vrot.slane %v1540, 1
        %v1542 = vmax.f32 %v1540, %v1541
        %p1543 = scmp.le.s32.totalorder %s1521, %s1520
        %p1544 = por %p1281, %p1543
        %s1545 = scalar_select %p1544, 1, 0
        %v1546 = vstv %s1545
        %vm1547 = vcmp.eq.s32.totalorder %v1546, 1
        %v1548 = vsel %vm1547, 0.0, %v1542
        %v1549 = vsel %vm544, %v1548, %v1519
        %s1550 = sld [smem:[#allocation6 + %s546]]
        %s1551 = sld [smem:[#allocation7 + %s546]]
        %v1552 = vstv %s1550
        %vm1553 = vcmp.ge.s32.totalorder %v265, %v1552
        %vm1554 = vcmp.ge.s32.totalorder %v266, %v1552
        %v1555 = vstv %s1551
        %vm1556 = vcmp.lt.s32.totalorder %v265, %v1555
        %vm1557 = vcmp.lt.s32.totalorder %v266, %v1555
        %vm1558 = vmand %vm1553, %vm1556
        %vm1559 = vmand %vm1554, %vm1557
        %v1560 = vsel %vm1558, 1, 0
        %v1561 = vsel %vm1559, 1, 0
        %vm1562 = vcmp.eq.s32.totalorder %v1560, 1
        %vm1563 = vcmp.eq.s32.totalorder %v1561, 1
        %v1564 = vsel %vm1562, %v1474, -inf
        %v1565 = vsel %vm1563, %v1489, -inf
        %v1566 = vmax.f32 %v1564, %v1565
        %v1567 = vrot.slane %v1566, 4
        %v1568 = vmax.f32 %v1566, %v1567
        %v1569 = vrot.slane %v1568, 2
        %v1570 = vmax.f32 %v1568, %v1569
        %v1571 = vrot.slane %v1570, 1
        %v1572 = vmax.f32 %v1570, %v1571
        %p1573 = scmp.le.s32.totalorder %s1551, %s1550
        %p1574 = por %p1281, %p1573
        %s1575 = scalar_select %p1574, 1, 0
        %v1576 = vstv %s1575
        %vm1577 = vcmp.eq.s32.totalorder %v1576, 1
        %v1578 = vsel %vm1577, 0.0, %v1572
        %v1579 = vsel %vm578, %v1578, %v1549
        %s1580 = sld [smem:[#allocation6 + %s580]]
        %s1581 = sld [smem:[#allocation7 + %s580]]
        %v1582 = vstv %s1580
        %vm1583 = vcmp.ge.s32.totalorder %v265, %v1582
        %vm1584 = vcmp.ge.s32.totalorder %v266, %v1582
        %v1585 = vstv %s1581
        %vm1586 = vcmp.lt.s32.totalorder %v265, %v1585
        %vm1587 = vcmp.lt.s32.totalorder %v266, %v1585
        %vm1588 = vmand %vm1583, %vm1586
        %vm1589 = vmand %vm1584, %vm1587
        %v1590 = vsel %vm1588, 1, 0
        %v1591 = vsel %vm1589, 1, 0
        %vm1592 = vcmp.eq.s32.totalorder %v1590, 1
        %vm1593 = vcmp.eq.s32.totalorder %v1591, 1
        %v1594 = vsel %vm1592, %v1474, -inf
        %v1595 = vsel %vm1593, %v1489, -inf
        %v1596 = vmax.f32 %v1594, %v1595
        %v1597 = vrot.slane %v1596, 4
        %v1598 = vmax.f32 %v1596, %v1597
        %v1599 = vrot.slane %v1598, 2
        %v1600 = vmax.f32 %v1598, %v1599
        %v1601 = vrot.slane %v1600, 1
        %v1602 = vmax.f32 %v1600, %v1601
        %p1603 = scmp.le.s32.totalorder %s1581, %s1580
        %p1604 = por %p1281, %p1603
        %s1605 = scalar_select %p1604, 1, 0
        %v1606 = vstv %s1605
        %vm1607 = vcmp.eq.s32.totalorder %v1606, 1
        %v1608 = vsel %vm1607, 0.0, %v1602
        %v1609 = vsel %vm612, %v1608, %v1579
        %1610 = vst [vmem:[%s213 + $0xc] sm:$0xf] %v1609
        %s1611 = sand.u32 %s124, 1
        %s1612 = scalar_lea.sflag [#allocation11], %s1611
        %s1613 = sand.u32 %s124, 1
        %s1614 = smul.addr %s1613, 16
        %s1615 = scalar_lea.vmem [#allocation12], %s1614
        // Predicated region
        $region33: #{tpu_custom_call.1} parent=27 // pred_check
          %p1616 = pneg %p134
        $region34: #{tpu_custom_call.1} parent=27 // pred_check_branch
          %1618 = sbr.rel (%p1616) target = $region36
        $region35: #{tpu_custom_call.1} parent=27 // pred_region
          %s1619 = sld [smem:[#allocation8 + %s54]]
          %s1621 = ssub.s32 256, 256
          %1622 = vsyncadd %s1612, %s1621
          %s1623 = smul.addr %s1619, 2
          %s1624 = sadd.s32 %s53, %s1623
          %s1625 = smul.addr %s1624, 128
          %s1626 = scalar_lea.hbm %s8, %s1625
          %s1627 = sshll.u32 %s1615, 4
          %s1628 = int_to_ptr.vmem [resolvable:$true] %s1627
          %1633 = dma.vmem_to_hbm [thread:$0]  %s1628, 256, %s1626, %s1612, 128, 128, 8
        $region36: #{tpu_custom_call.1} parent=27 // pred_fallthru
          _
      $region28: #{tpu_custom_call.1} parent=5 // pred_fallthru
        _
      %p1634 = scmp.le.s32.totalorder 2, %s44
      // Predicated region
      $region37: #{tpu_custom_call.1} parent=5 // pred_check
        %p1635 = pneg %p1634
      $region38: #{tpu_custom_call.1} parent=5 // pred_check_branch
        %1637 = sbr.rel (%p1635) target = $region40
      $region39: #{tpu_custom_call.1} parent=5 // pred_region
        %s1638 = ssub.s32 %s44, 2
        // Predicated region
        $region41: #{tpu_custom_call.1} parent=39 // pred_check
          %p1639 = pneg %p140
        $region42: #{tpu_custom_call.1} parent=39 // pred_check_branch
          %1641 = sbr.rel (%p1639) target = $region44
        $region43: #{tpu_custom_call.1} parent=39 // pred_region
          %s1642 = sand.u32 %s125, 1
          %s1643 = scalar_lea.sflag [#allocation11], %s1642
          %s1644 = sand.u32 %s125, 1
          %s1645 = smul.addr %s1644, 16
          %s1646 = scalar_lea.vmem [#allocation12], %s1645
          %1647 = dma.done %s1643, 256
        $region44: #{tpu_custom_call.1} parent=39 // pred_fallthru
          _
      $region40: #{tpu_custom_call.1} parent=5 // pred_fallthru
        _
    $region6: #{tpu_custom_call.1} parent=1 // loop_footer
      %s48 = sadd.s32 1, %s44
    $region7: #{tpu_custom_call.1} parent=1 // loop_footer_branch
      %43 = sbr.rel target = $region3
    $region8: #{tpu_custom_call.1} parent=1 // loop_exit
      _
    %1648 = vsyncpa [#allocation10], 1
    %s1649 = scalar_lea.sflag [#allocation10], 1
    %1650 = vsyncpa %s1649, 1
    %1651 = vsyncpa [#allocation11], 1
    %s1652 = scalar_lea.sflag [#allocation11], 1
    %1653 = vsyncpa %s1652, 1

</llo_original>
